<compile_context>
chip_gen: v7x
topology: tpu7x:2x2x1
jax: 0.10.0
libtpu: 0.0.40
codegen_flags: <defaults>
</compile_context>

<pallas_src>
import functools

import jax
import jax.numpy as jnp
from jax.experimental import pallas as pl
from jax.experimental.pallas import tpu as pltpu


# ---------------------------------------------------------------------------
# Generation-aware tiling configuration
# ---------------------------------------------------------------------------

def _round_up(x, m):
    return ((x + m - 1) // m) * m


@functools.lru_cache(maxsize=1)
def _gen_config():
    """Adjacency tile targets / VMEM limit per TPU generation."""
    kind = ""
    try:
        kind = jax.devices()[0].device_kind.lower()
    except Exception:
        pass
    try:
        vmem_bytes = int(pltpu.get_tpu_info().vmem_capacity_bytes)
    except Exception:
        vmem_bytes = 64 * 1024 * 1024  # conservative fallback
    is_v7 = ("7" in kind) or (vmem_bytes <= 80 * 1024 * 1024)
    if is_v7:
        # 2 x (1024 x 2048) bf16 adj buffers = 8 MiB << 48 MiB cap; keep headroom
        # since v7x only has 64 MiB physical VMEM per TensorCore.
        return {"tm": 1024, "tk": 2048, "vmem_limit": 48 * 1024 * 1024,
                "two_core": True}
    # v5e / v6e: 128 MiB physical VMEM, 1 TC -> spend headroom on bigger tiles.
    # 2 x (1024 x 4096) bf16 adj buffers = 16 MiB out of a 96 MiB cap.
    return {"tm": 1024, "tk": 4096, "vmem_limit": 96 * 1024 * 1024,
            "two_core": False}


def _pick_row_tile(n, cfg):
    """(tile, padded_extent) for the destination-node (row / 'parallel') axis."""
    target = cfg["tm"]
    if n <= target:
        # On v7x the row axis is the only thing sharding work across the two
        # TensorCores: split it in two once there is enough work to matter.
        if cfg["two_core"] and n >= 256:
            tm = _round_up(-(-n // 2), 16)  # 16 satisfies f32(8) and bf16(16) sublane tiling
            return tm, 2 * tm
        return n, n                         # full-dim block is always legal
    return target, _round_up(n, target)


def _pick_src_tile(n, cfg):
    """(tile, padded_extent) for the source-node (reduction) axis."""
    target = cfg["tk"]
    if n <= target:
        return n, n
    return target, _round_up(n, target)


def _pad_rows(x, n_pad):
    n = x.shape[0]
    if n_pad == n:
        return x
    return jnp.pad(x, ((0, n_pad - n), (0, 0)))


def _pad_2d(x, r_pad, c_pad):
    r, c = x.shape
    if r_pad == r and c_pad == c:
        return x
    return jnp.pad(x, ((0, r_pad - r), (0, c_pad - c)))


def _compiler_params(cfg):
    return pltpu.CompilerParams(
        dimension_semantics=("parallel", "arbitrary"),
        vmem_limit_bytes=cfg["vmem_limit"],
    )


# ---------------------------------------------------------------------------
# Fused even-layer side kernel:
#   gcn_out   = adj @ XW + bg                      (XW = x @ Wg precomputed, bf16)
#   union_out = relu(self @ W1t + gcn_out @ W2t + bu)   == relu(Linear(cat[self, gcn_out]))
# ---------------------------------------------------------------------------

def _even_side_kernel(adj_ref, xw_ref, self_ref,
                      bg_ref, wu_self_ref, wu_n_ref, bu_ref,
                      gcn_out_ref, union_out_ref,
                      acc_ref):
    k = pl.program_id(1)

    @pl.when(k == 0)
    def _():
        acc_ref[...] = jnp.zeros_like(acc_ref)

    # bf16 x bf16 MXU matmul, f32 accumulation.
    acc_ref[...] += jnp.dot(adj_ref[...], xw_ref[...],
                            preferred_element_type=jnp.float32)

    @pl.when(k == pl.num_programs(1) - 1)
    def _():
        gcn_out = acc_ref[...] + bg_ref[...]          # User_n / Item_n
        gcn_out_ref[...] = gcn_out
        # union Linear on cat([self, gcn_out]) with pre-split W^T -> no concat in HBM.
        y = (jnp.dot(self_ref[...], wu_self_ref[...], preferred_element_type=jnp.float32)
             + jnp.dot(gcn_out, wu_n_ref[...], preferred_element_type=jnp.float32)
             + bu_ref[...])
        union_out_ref[...] = jnp.maximum(y, 0.0)      # fused ReLU


def dgcn_even_side(adj, x, self_fea, gcn_p, union_p):
    """Returns (relu(union(cat[self, gcn_out])), gcn_out) for one side of an even layer."""
    n_dst, n_src = adj.shape
    hid = gcn_p["w"].shape[1]
    feat = self_fea.shape[1]
    cfg = _gen_config()

    tm, n_dst_p = _pick_row_tile(n_dst, cfg)
    tk, n_src_p = _pick_src_tile(n_src, cfg)

    adj_p = _pad_2d(adj.astype(jnp.bfloat16), n_dst_p, n_src_p)
    # Hoisted projection: XW = x @ Wg (tiny; stays out of the adjacency-bound kernel).
    xw_p = _pad_rows((x @ gcn_p["w"]).astype(jnp.bfloat16), n_src_p)
    self_p = _pad_rows(self_fea, n_dst_p)

    grid = (n_dst_p // tm, n_src_p // tk)
    row_tiles = grid[0]

    flops = 2 * n_dst_p * n_src_p * hid + 2 * n_dst_p * feat * (feat + hid)
    bytes_accessed = (2 * n_dst_p * n_src_p                # adj (bf16)
                      + 2 * row_tiles * n_src_p * hid      # XW re-streamed per row tile (bf16)
                      + 4 * n_dst_p * feat                 # self features
                      + 4 * n_dst_p * (hid + feat)         # outputs
                      + 4 * (hid + feat * feat + hid * feat + feat))

    grid_spec = pltpu.PrefetchScalarGridSpec(
        num_scalar_prefetch=0,
        grid=grid,
        in_specs=[
            pl.BlockSpec((tm, tk), lambda i, k: (i, k)),        # adj tile (bf16)
            pl.BlockSpec((tk, hid), lambda i, k: (k, 0)),       # XW tile (bf16)
            pl.BlockSpec((tm, feat), lambda i, k: (i, 0)),      # self features
            pl.BlockSpec((1, hid), lambda i, k: (0, 0)),        # GCN bias
            pl.BlockSpec((feat, feat), lambda i, k: (0, 0)),    # union W^T (self block)
            pl.BlockSpec((hid, feat), lambda i, k: (0, 0)),     # union W^T (gcn block)
            pl.BlockSpec((1, feat), lambda i, k: (0, 0)),       # union bias
        ],
        out_specs=(
            pl.BlockSpec((tm, hid), lambda i, k: (i, 0)),       # gcn_out
            pl.BlockSpec((tm, feat), lambda i, k: (i, 0)),      # union_out
        ),
        scratch_shapes=[pltpu.VMEM((tm, hid), jnp.float32)],
    )

    gcn_out, union_out = pl.pallas_call(
        _even_side_kernel,
        out_shape=(jax.ShapeDtypeStruct((n_dst_p, hid), jnp.float32),
                   jax.ShapeDtypeStruct((n_dst_p, feat), jnp.float32)),
        grid_spec=grid_spec,
        compiler_params=_compiler_params(cfg),
        cost_estimate=pl.CostEstimate(flops=flops, transcendentals=0,
                                      bytes_accessed=bytes_accessed),
    )(adj_p, xw_p, self_p,
      gcn_p["b"].reshape(1, -1),
      union_p["w_self_t"], union_p["w_n_t"], union_p["b"].reshape(1, -1))

    return union_out[:n_dst], gcn_out[:n_dst]


# ---------------------------------------------------------------------------
# Fused odd-layer side kernel: the two GCNs that share one adjacency are fused into a
# single 64-wide RHS (xw_cat = [XW_n2 | XW_n1]) so the big adj tile streams through the
# MXU once per step, then
#   n_cat     = adj @ xw_cat + [b_n2 | b_n1]                       (= [n2 | n1])
#   union_out = relu(self @ W_self_t + n_cat @ W_n_t + bu)
#             == relu(Linear(cat[self, n2, n1]))
# n1/n2 never hit HBM.
# ---------------------------------------------------------------------------

def _odd_side_kernel(adj_ref, xw_ref, self_ref,
                     bg_ref, wu_self_ref, wu_n_ref, bu_ref,
                     union_out_ref,
                     acc_ref):
    k = pl.program_id(1)

    @pl.when(k == 0)
    def _():
        acc_ref[...] = jnp.zeros_like(acc_ref)

    # One 64-wide bf16 matmul instead of two 32-wide ones (adj streamed once).
    acc_ref[...] += jnp.dot(adj_ref[...], xw_ref[...],
                            preferred_element_type=jnp.float32)

    @pl.when(k == pl.num_programs(1) - 1)
    def _():
        n_cat = acc_ref[...] + bg_ref[...]            # [n2 | n1]
        y = (jnp.dot(self_ref[...], wu_self_ref[...], preferred_element_type=jnp.float32)
             + jnp.dot(n_cat, wu_n_ref[...], preferred_element_type=jnp.float32)
             + bu_ref[...])
        union_out_ref[...] = jnp.maximum(y, 0.0)      # fused ReLU


def dgcn_odd_side(adj, x1, x2, self_fea, gcn1_p, gcn2_p, union1_p):
    """Fused odd-layer side: relu(union1(cat[self, gcn2(x2, adj), gcn1(x1, adj)]))."""
    n_dst, n_src = adj.shape
    o1 = gcn1_p["w"].shape[1]          # gc3/gc4 output width (n1)
    o2 = gcn2_p["w"].shape[1]          # gc1/gc2 output width (n2)
    o = o1 + o2
    feat = self_fea.shape[1]
    cfg = _gen_config()

    tm, n_dst_p = _pick_row_tile(n_dst, cfg)
    tk, n_src_p = _pick_src_tile(n_src, cfg)

    adj_p = _pad_2d(adj.astype(jnp.bfloat16), n_dst_p, n_src_p)
    # Hoisted projections, fused into one 64-wide RHS ordered [n2 | n1] to match the
    # union1 weight layout cat([self, n2, n1]).
    xw_cat = jnp.concatenate([x2 @ gcn2_p["w"], x1 @ gcn1_p["w"]], axis=1)
    xw_p = _pad_rows(xw_cat.astype(jnp.bfloat16), n_src_p)
    self_p = _pad_rows(self_fea, n_dst_p)
    b_cat = jnp.concatenate([gcn2_p["b"], gcn1_p["b"]]).reshape(1, -1)

    grid = (n_dst_p // tm, n_src_p // tk)
    row_tiles = grid[0]

    flops = 2 * n_dst_p * n_src_p * o + 2 * n_dst_p * feat * (feat + o)
    bytes_accessed = (2 * n_dst_p * n_src_p                # adj (bf16)
                      + 2 * row_tiles * n_src_p * o        # XW_cat re-streamed per row tile
                      + 4 * n_dst_p * feat                 # self features
                      + 4 * n_dst_p * feat                 # output
                      + 4 * (o + feat * feat + o * feat + feat))

    grid_spec = pltpu.PrefetchScalarGridSpec(
        num_scalar_prefetch=0,
        grid=grid,
        in_specs=[
            pl.BlockSpec((tm, tk), lambda i, k: (i, k)),        # adj tile (bf16)
            pl.BlockSpec((tk, o), lambda i, k: (k, 0)),         # fused XW tile (bf16)
            pl.BlockSpec((tm, feat), lambda i, k: (i, 0)),      # self features
            pl.BlockSpec((1, o), lambda i, k: (0, 0)),          # fused GCN bias [b_n2|b_n1]
            pl.BlockSpec((feat, feat), lambda i, k: (0, 0)),    # union1 W^T (self block)
            pl.BlockSpec((o, feat), lambda i, k: (0, 0)),       # union1 W^T ([n2|n1] block)
            pl.BlockSpec((1, feat), lambda i, k: (0, 0)),       # union1 bias
        ],
        out_specs=pl.BlockSpec((tm, feat), lambda i, k: (i, 0)),
        scratch_shapes=[pltpu.VMEM((tm, o), jnp.float32)],
    )

    union_out = pl.pallas_call(
        _odd_side_kernel,
        out_shape=jax.ShapeDtypeStruct((n_dst_p, feat), jnp.float32),
        grid_spec=grid_spec,
        compiler_params=_compiler_params(cfg),
        cost_estimate=pl.CostEstimate(flops=flops, transcendentals=0,
                                      bytes_accessed=bytes_accessed),
    )(adj_p, xw_p, self_p, b_cat,
      union1_p["w_self_t"], union1_p["w_n_t"], union1_p["b"].reshape(1, -1))

    return union_out[:n_dst]


# ---------------------------------------------------------------------------
# Parameter initialization (deterministic, PyTorch-like uniform fan-in init).
# Linear weights are split / transposed ONCE here so the hot path never transposes
# or concatenates.
# ---------------------------------------------------------------------------

def _init_linear_w_b(key, d_in, d_out):
    k1, k2 = jax.random.split(key)
    bound = 1.0 / (d_in ** 0.5)
    w = jax.random.uniform(k1, (d_out, d_in), jnp.float32, -bound, bound)
    b = jax.random.uniform(k2, (d_out,), jnp.float32, -bound, bound)
    return w, b


def _init_gcn(key, d_in, d_out):
    k1, k2 = jax.random.split(key)
    bound = 1.0 / (d_out ** 0.5)
    return {
        "w": jax.random.uniform(k1, (d_in, d_out), jnp.float32, -bound, bound),
        "b": jax.random.uniform(k2, (d_out,), jnp.float32, -bound, bound),
    }


def init_dgcn_layer(key, opt):
    feat, hid = opt["feature_dim"], opt["hidden_dim"]
    ks = jax.random.split(key, 8)

    def union2(k):
        # nn.Linear(2*feat, feat): y = cat([self, n]) @ W^T + b -> split & transpose once.
        w, b = _init_linear_w_b(k, 2 * feat, feat)
        return {"w_self_t": w[:, :feat].T, "w_n_t": w[:, feat:].T, "b": b}

    def union3(k):
        # nn.Linear(3*feat, feat): y = cat([self, n2, n1]) @ W^T + b.
        # Keep the [n2 | n1] block contiguous so the kernel does one K=2*feat dot.
        w, b = _init_linear_w_b(k, 3 * feat, feat)
        return {"w_self_t": w[:, :feat].T, "w_n_t": w[:, feat:].T, "b": b}

    return {
        "gc1": _init_gcn(ks[0], feat, hid),
        "gc2": _init_gcn(ks[1], feat, hid),
        "gc3": _init_gcn(ks[2], hid, feat),
        "gc4": _init_gcn(ks[3], hid, feat),
        "user_union": union2(ks[4]),
        "item_union": union2(ks[5]),
        "user_union1": union3(ks[6]),
        "item_union1": union3(ks[7]),
    }


def init_gnn_params(key, opt):
    feat, hid = opt["feature_dim"], opt["hidden_dim"]
    # DGCNLayer implicitly requires feature_dim == hidden_dim (gc3/gc4 and the union
    # Linears are only shape-consistent then) — assert it explicitly.
    assert feat == hid, "GNN forward requires opt['feature_dim'] == opt['hidden_dim']"
    n_layers = opt["GNN"]
    ks = jax.random.split(key, n_layers + 4)

    def mlp(k, d_in, d_out):
        w, b = _init_linear_w_b(k, d_in, d_out)
        return {"wt": w.T, "b": b}   # pre-transposed once at init

    return {
        "layers": [init_dgcn_layer(ks[i], opt) for i in range(n_layers)],
        "MLP_ul": mlp(ks[n_layers + 0], hid, hid),
        "MLP_ul1": mlp(ks[n_layers + 1], hid, 1),
        "MLP_vl": mlp(ks[n_layers + 2], hid, hid),
        "MLP_vl1": mlp(ks[n_layers + 3], hid, 1),
        # score_function1/2, mm2, mm3 are never used in GNN.forward -> omitted.
    }


# ---------------------------------------------------------------------------
# Forward pass (mirrors the PyTorch control flow exactly; dropout is eval-mode identity)
# ---------------------------------------------------------------------------

def dgcn_layer_forward(p, layer_idx, ufea, vfea, UV_adj, VU_adj):
    if layer_idx % 2 == 0:
        # User_n = gc1(vfea, UV_adj); User_h = relu(user_union(cat[ufea, User_n]))
        User_h, User_n = dgcn_even_side(UV_adj, vfea, ufea, p["gc1"], p["user_union"])
        Item_h, Item_n = dgcn_even_side(VU_adj, ufea, vfea, p["gc2"], p["item_union"])
        return ([User_h, User_n, ufea], [Item_h, Item_n, vfea])
    else:
        # User_n1 = gc3(vfea[0], UV_adj); User_n2 = gc1(vfea[1], UV_adj) — fused (shared adj)
        User_h = dgcn_odd_side(UV_adj, vfea[0], vfea[1], ufea[0],
                               p["gc3"], p["gc1"], p["user_union1"])
        Item_h = dgcn_odd_side(VU_adj, ufea[0], ufea[1], vfea[0],
                               p["gc4"], p["gc2"], p["item_union1"])
        return User_h, Item_h


def gnn_forward(params, opt, ufea, vfea, UV_adj, VU_adj, adj):
    del adj  # `adj` is an argument of the PyTorch forward but is never used
    n_layers = opt["GNN"]
    learn_user, learn_item = ufea, vfea
    user, item = [], []
    for i in range(n_layers):
        learn_user, learn_item = dgcn_layer_forward(
            params["layers"][i], i, learn_user, learn_item, UV_adj, VU_adj)
        if i % 2 == 1:
            user.append(learn_user)
            item.append(learn_item)
        else:
            user.append(learn_user[0])
            item.append(learn_item[0])

    users_stacked = jnp.stack(user, axis=0)   # (L, n_user, D)
    items_stacked = jnp.stack(item, axis=0)   # (L, n_item, D)
    Hu = users_stacked.mean(axis=1)           # (L, D)
    Hv = items_stacked.mean(axis=1)           # (L, D)

    # Tiny (L x hidden) attention MLPs: plain jnp — a Pallas launch would cost more than
    # the matmul itself (weights already stored transposed).
    def attn(H, p_hid, p_out):
        h = jnp.maximum(H @ p_hid["wt"] + p_hid["b"], 0.0)
        return jax.nn.softmax(h @ p_out["wt"] + p_out["b"], axis=0)

    alpha_ul = attn(Hu, params["MLP_ul"], params["MLP_ul1"])   # (L, 1)
    alpha_vl = attn(Hv, params["MLP_vl"], params["MLP_vl1"])   # (L, 1)

    # alpha.repeat(1, N).unsqueeze(-1) == broadcast of the per-layer scalar over nodes & feats
    h_u_final = (users_stacked * alpha_ul[:, :, None]).mean(axis=0)
    h_v_final = (items_stacked * alpha_vl[:, :, None]).mean(axis=0)

    if n_layers % 2 == 0:
        return (learn_user, learn_item, h_u_final, h_v_final, alpha_ul, alpha_vl, Hu, Hv)
    return (learn_user[0], learn_item[0], h_u_final, h_v_final, alpha_ul, alpha_vl, Hu, Hv)


# ---------------------------------------------------------------------------
# Example run
# ---------------------------------------------------------------------------

if __name__ == "__main__":
    opt = {"feature_dim": 32, "hidden_dim": 32, "GNN": 2, "dropout": 0.0, "leakey": 0.1}
    n_user, n_item = 16, 24

    key = jax.random.PRNGKey(0)
    k_u, k_v, k_adj, k_params = jax.random.split(key, 4)

    ufea = jax.random.normal(k_u, (n_user, opt["feature_dim"]), jnp.float32)
    vfea = jax.random.normal(k_v, (n_item, opt["feature_dim"]), jnp.float32)

    # Dense, row-normalized bipartite adjacency matrices (torch.spmm -> dense matmul here).
    uv_mask = (jax.random.uniform(k_adj, (n_user, n_item)) < 0.3).astype(jnp.float32)
    UV_adj = uv_mask / jnp.maximum(uv_mask.sum(axis=1, keepdims=True), 1.0)
    vu_mask = uv_mask.T
    VU_adj = vu_mask / jnp.maximum(vu_mask.sum(axis=1, keepdims=True), 1.0)
    adj = jnp.zeros((n_user + n_item, n_user + n_item), jnp.float32)  # unused in forward

    params = init_gnn_params(k_params, opt)

    fwd = jax.jit(lambda p, uf, vf, uv, vu, a: gnn_forward(p, opt, uf, vf, uv, vu, a))
    outs = fwd(params, ufea, vfea, UV_adj, VU_adj, adj)
    jax.block_until_ready(outs)

    learn_user, learn_item, h_u_final, h_v_final, alpha_ul, alpha_vl, Hu, Hv = outs
    assert learn_user.shape == (n_user, opt["feature_dim"])
    assert learn_item.shape == (n_item, opt["feature_dim"])
    assert h_u_final.shape == (n_user, opt["feature_dim"])
    assert h_v_final.shape == (n_item, opt["feature_dim"])
    assert alpha_ul.shape == (opt["GNN"], 1) and alpha_vl.shape == (opt["GNN"], 1)
    assert Hu.shape == (opt["GNN"], opt["hidden_dim"])
    assert Hv.shape == (opt["GNN"], opt["hidden_dim"])

    print("KERNEL_OK")
</pallas_src>

<mosaic_0001>
module attributes {stable_mosaic.version = 11 : i64} {
  func.func @_even_side_kernel(%arg0: i32, %arg1: i32, %arg2: memref<24x16xbf16, #tpu.memory_space<vmem>>, %arg3: memref<16x32xbf16, #tpu.memory_space<vmem>>, %arg4: memref<24x32xf32, #tpu.memory_space<vmem>>, %arg5: memref<1x32xf32, #tpu.memory_space<vmem>>, %arg6: memref<32x32xf32, #tpu.memory_space<vmem>>, %arg7: memref<32x32xf32, #tpu.memory_space<vmem>>, %arg8: memref<1x32xf32, #tpu.memory_space<vmem>>, %arg9: memref<24x32xf32, #tpu.memory_space<vmem>>, %arg10: memref<24x32xf32, #tpu.memory_space<vmem>>, %arg11: memref<24x32xf32, #tpu.memory_space<vmem>>) attributes {dimension_semantics = [#tpu.dimension_semantics<parallel>, #tpu.dimension_semantics<arbitrary>], iteration_bounds = array<i64: 1, 1>, scalar_prefetch = 0 : i64, scratch_operands = 1 : i64, tpu.core_type = #tpu.core_type<tc>, window_params = [{transform_indices = @transform_0, window_bounds = array<i64: 24, 16>}, {transform_indices = @transform_1, window_bounds = array<i64: 16, 32>}, {transform_indices = @transform_2, window_bounds = array<i64: 24, 32>}, {pipeline_mode = #tpu.pipeline_mode<synchronous>, transform_indices = @transform_3, window_bounds = array<i64: 1, 32>}, {pipeline_mode = #tpu.pipeline_mode<synchronous>, transform_indices = @transform_4, window_bounds = array<i64: 32, 32>}, {pipeline_mode = #tpu.pipeline_mode<synchronous>, transform_indices = @transform_5, window_bounds = array<i64: 32, 32>}, {pipeline_mode = #tpu.pipeline_mode<synchronous>, transform_indices = @transform_6, window_bounds = array<i64: 1, 32>}, {transform_indices = @transform_7, window_bounds = array<i64: 24, 32>}, {transform_indices = @transform_8, window_bounds = array<i64: 24, 32>}]} {
    %c0_i32 = arith.constant 0 : i32
    %0 = arith.cmpi eq, %arg1, %c0_i32 : i32
    %1 = arith.extui %0 : i1 to i32
    %c0_i32_0 = arith.constant 0 : i32
    %2 = arith.cmpi ne, %1, %c0_i32_0 : i32
    scf.if %2 {
      %cst_10 = arith.constant 0.000000e+00 : f32
      %12 = vector.broadcast %cst_10 : f32 to vector<24x32xf32>
      %c0_11 = arith.constant 0 : index
      %c0_12 = arith.constant 0 : index
      %13 = vector.load %arg11[%c0_11, %c0_12] : memref<24x32xf32, #tpu.memory_space<vmem>>, vector<24x32xf32>
      tpu.vector_store %arg11[%c0_11, %c0_12], %12 {strides = array<i32>} : memref<24x32xf32, #tpu.memory_space<vmem>>, vector<24x32xf32>,
    } else {
    }
    %c0 = arith.constant 0 : index
    %c0_1 = arith.constant 0 : index
    %3 = vector.load %arg11[%c0, %c0_1] : memref<24x32xf32, #tpu.memory_space<vmem>>, vector<24x32xf32>
    %c0_2 = arith.constant 0 : index
    %c0_3 = arith.constant 0 : index
    %4 = vector.load %arg2[%c0_2, %c0_3] : memref<24x16xbf16, #tpu.memory_space<vmem>>, vector<24x16xbf16>
    %c0_4 = arith.constant 0 : index
    %c0_5 = arith.constant 0 : index
    %5 = vector.load %arg3[%c0_4, %c0_5] : memref<16x32xbf16, #tpu.memory_space<vmem>>, vector<16x32xbf16>
    %cst = arith.constant dense<0.000000e+00> : vector<24x32xf32>
    %6 = tpu.matmul %4, %5, %cst {dimension_numbers = #tpu.dot_dimension_numbers<[1], [0], [0], [1], [0, 0, 1, 1], [], []>} : vector<24x16xbf16>, vector<16x32xbf16>, vector<24x32xf32> -> vector<24x32xf32>
    %7 = arith.addf %3, %6 : vector<24x32xf32>
    %c0_6 = arith.constant 0 : index
    %c0_7 = arith.constant 0 : index
    %8 = vector.load %arg11[%c0_6, %c0_7] : memref<24x32xf32, #tpu.memory_space<vmem>>, vector<24x32xf32>
    tpu.vector_store %arg11[%c0_6, %c0_7], %7 {strides = array<i32>} : memref<24x32xf32, #tpu.memory_space<vmem>>, vector<24x32xf32>,
    %c0_i32_8 = arith.constant 0 : i32
    %9 = arith.cmpi eq, %arg1, %c0_i32_8 : i32
    %10 = arith.extui %9 : i1 to i32
    %c0_i32_9 = arith.constant 0 : i32
    %11 = arith.cmpi ne, %10, %c0_i32_9 : i32
    scf.if %11 {
      %c0_10 = arith.constant 0 : index
      %c0_11 = arith.constant 0 : index
      %12 = vector.load %arg11[%c0_10, %c0_11] : memref<24x32xf32, #tpu.memory_space<vmem>>, vector<24x32xf32>
      %c0_12 = arith.constant 0 : index
      %c0_13 = arith.constant 0 : index
      %13 = vector.load %arg5[%c0_12, %c0_13] : memref<1x32xf32, #tpu.memory_space<vmem>>, vector<1x32xf32>
      %14 = vector.broadcast %13 : vector<1x32xf32> to vector<24x32xf32>
      %15 = arith.addf %12, %14 : vector<24x32xf32>
      %c0_14 = arith.constant 0 : index
      %c0_15 = arith.constant 0 : index
      %16 = vector.load %arg9[%c0_14, %c0_15] : memref<24x32xf32, #tpu.memory_space<vmem>>, vector<24x32xf32>
      tpu.vector_store %arg9[%c0_14, %c0_15], %15 {strides = array<i32>} : memref<24x32xf32, #tpu.memory_space<vmem>>, vector<24x32xf32>,
      %c0_16 = arith.constant 0 : index
      %c0_17 = arith.constant 0 : index
      %17 = vector.load %arg4[%c0_16, %c0_17] : memref<24x32xf32, #tpu.memory_space<vmem>>, vector<24x32xf32>
      %c0_18 = arith.constant 0 : index
      %c0_19 = arith.constant 0 : index
      %18 = vector.load %arg6[%c0_18, %c0_19] : memref<32x32xf32, #tpu.memory_space<vmem>>, vector<32x32xf32>
      %cst_20 = arith.constant dense<0.000000e+00> : vector<24x32xf32>
      %19 = tpu.matmul %17, %18, %cst_20 {dimension_numbers = #tpu.dot_dimension_numbers<[1], [0], [0], [1], [0, 0, 1, 1], [], []>} : vector<24x32xf32>, vector<32x32xf32>, vector<24x32xf32> -> vector<24x32xf32>
      %c0_21 = arith.constant 0 : index
      %c0_22 = arith.constant 0 : index
      %20 = vector.load %arg7[%c0_21, %c0_22] : memref<32x32xf32, #tpu.memory_space<vmem>>, vector<32x32xf32>
      %cst_23 = arith.constant dense<0.000000e+00> : vector<24x32xf32>
      %21 = tpu.matmul %15, %20, %cst_23 {dimension_numbers = #tpu.dot_dimension_numbers<[1], [0], [0], [1], [0, 0, 1, 1], [], []>} : vector<24x32xf32>, vector<32x32xf32>, vector<24x32xf32> -> vector<24x32xf32>
      %22 = arith.addf %19, %21 : vector<24x32xf32>
      %c0_24 = arith.constant 0 : index
      %c0_25 = arith.constant 0 : index
      %23 = vector.load %arg8[%c0_24, %c0_25] : memref<1x32xf32, #tpu.memory_space<vmem>>, vector<1x32xf32>
      %24 = vector.broadcast %23 : vector<1x32xf32> to vector<24x32xf32>
      %25 = arith.addf %22, %24 : vector<24x32xf32>
      %cst_26 = arith.constant 0.000000e+00 : f32
      %26 = vector.broadcast %cst_26 : f32 to vector<24x32xf32>
      %27 = arith.maximumf %25, %26 : vector<24x32xf32>
      %c0_27 = arith.constant 0 : index
      %c0_28 = arith.constant 0 : index
      %28 = vector.load %arg10[%c0_27, %c0_28] : memref<24x32xf32, #tpu.memory_space<vmem>>, vector<24x32xf32>
      tpu.vector_store %arg10[%c0_27, %c0_28], %27 {strides = array<i32>} : memref<24x32xf32, #tpu.memory_space<vmem>>, vector<24x32xf32>,
    } else {
    }
    return
  }
  func.func @transform_0(%arg0: i32, %arg1: i32) -> (i32, i32) {
    %c0_i32 = arith.constant 0 : i32
    return %arg0, %arg1 : i32, i32
  }
  func.func @transform_1(%arg0: i32, %arg1: i32) -> (i32, i32) {
    %c0_i32 = arith.constant 0 : i32
    %c0_i32_0 = arith.constant 0 : i32
    return %arg1, %c0_i32 : i32, i32
  }
  func.func @transform_2(%arg0: i32, %arg1: i32) -> (i32, i32) {
    %c0_i32 = arith.constant 0 : i32
    %c0_i32_0 = arith.constant 0 : i32
    return %arg0, %c0_i32 : i32, i32
  }
  func.func @transform_3(%arg0: i32, %arg1: i32) -> (i32, i32) {
    %c0_i32 = arith.constant 0 : i32
    %c0_i32_0 = arith.constant 0 : i32
    %c0_i32_1 = arith.constant 0 : i32
    return %c0_i32, %c0_i32_0 : i32, i32
  }
  func.func @transform_4(%arg0: i32, %arg1: i32) -> (i32, i32) {
    %c0_i32 = arith.constant 0 : i32
    %c0_i32_0 = arith.constant 0 : i32
    %c0_i32_1 = arith.constant 0 : i32
    return %c0_i32, %c0_i32_0 : i32, i32
  }
  func.func @transform_5(%arg0: i32, %arg1: i32) -> (i32, i32) {
    %c0_i32 = arith.constant 0 : i32
    %c0_i32_0 = arith.constant 0 : i32
    %c0_i32_1 = arith.constant 0 : i32
    return %c0_i32, %c0_i32_0 : i32, i32
  }
  func.func @transform_6(%arg0: i32, %arg1: i32) -> (i32, i32) {
    %c0_i32 = arith.constant 0 : i32
    %c0_i32_0 = arith.constant 0 : i32
    %c0_i32_1 = arith.constant 0 : i32
    return %c0_i32, %c0_i32_0 : i32, i32
  }
  func.func @transform_7(%arg0: i32, %arg1: i32) -> (i32, i32) {
    %c0_i32 = arith.constant 0 : i32
    %c0_i32_0 = arith.constant 0 : i32
    return %arg0, %c0_i32 : i32, i32
  }
  func.func @transform_8(%arg0: i32, %arg1: i32) -> (i32, i32) {
    %c0_i32 = arith.constant 0 : i32
    %c0_i32_0 = arith.constant 0 : i32
    return %arg0, %c0_i32 : i32, i32
  }
}

module attributes {stable_mosaic.version = 11 : i64} {
  func.func @_even_side_kernel(%arg0: i32, %arg1: i32, %arg2: memref<16x24xbf16, #tpu.memory_space<vmem>>, %arg3: memref<24x32xbf16, #tpu.memory_space<vmem>>, %arg4: memref<16x32xf32, #tpu.memory_space<vmem>>, %arg5: memref<1x32xf32, #tpu.memory_space<vmem>>, %arg6: memref<32x32xf32, #tpu.memory_space<vmem>>, %arg7: memref<32x32xf32, #tpu.memory_space<vmem>>, %arg8: memref<1x32xf32, #tpu.memory_space<vmem>>, %arg9: memref<16x32xf32, #tpu.memory_space<vmem>>, %arg10: memref<16x32xf32, #tpu.memory_space<vmem>>, %arg11: memref<16x32xf32, #tpu.memory_space<vmem>>) attributes {dimension_semantics = [#tpu.dimension_semantics<parallel>, #tpu.dimension_semantics<arbitrary>], iteration_bounds = array<i64: 1, 1>, scalar_prefetch = 0 : i64, scratch_operands = 1 : i64, tpu.core_type = #tpu.core_type<tc>, window_params = [{transform_indices = @transform_0, window_bounds = array<i64: 16, 24>}, {transform_indices = @transform_1, window_bounds = array<i64: 24, 32>}, {transform_indices = @transform_2, window_bounds = array<i64: 16, 32>}, {pipeline_mode = #tpu.pipeline_mode<synchronous>, transform_indices = @transform_3, window_bounds = array<i64: 1, 32>}, {pipeline_mode = #tpu.pipeline_mode<synchronous>, transform_indices = @transform_4, window_bounds = array<i64: 32, 32>}, {pipeline_mode = #tpu.pipeline_mode<synchronous>, transform_indices = @transform_5, window_bounds = array<i64: 32, 32>}, {pipeline_mode = #tpu.pipeline_mode<synchronous>, transform_indices = @transform_6, window_bounds = array<i64: 1, 32>}, {transform_indices = @transform_7, window_bounds = array<i64: 16, 32>}, {transform_indices = @transform_8, window_bounds = array<i64: 16, 32>}]} {
    %c0_i32 = arith.constant 0 : i32
    %0 = arith.cmpi eq, %arg1, %c0_i32 : i32
    %1 = arith.extui %0 : i1 to i32
    %c0_i32_0 = arith.constant 0 : i32
    %2 = arith.cmpi ne, %1, %c0_i32_0 : i32
    scf.if %2 {
      %cst_10 = arith.constant 0.000000e+00 : f32
      %12 = vector.broadcast %cst_10 : f32 to vector<16x32xf32>
      %c0_11 = arith.constant 0 : index
      %c0_12 = arith.constant 0 : index
      %13 = vector.load %arg11[%c0_11, %c0_12] : memref<16x32xf32, #tpu.memory_space<vmem>>, vector<16x32xf32>
      tpu.vector_store %arg11[%c0_11, %c0_12], %12 {strides = array<i32>} : memref<16x32xf32, #tpu.memory_space<vmem>>, vector<16x32xf32>,
    } else {
    }
    %c0 = arith.constant 0 : index
    %c0_1 = arith.constant 0 : index
    %3 = vector.load %arg11[%c0, %c0_1] : memref<16x32xf32, #tpu.memory_space<vmem>>, vector<16x32xf32>
    %c0_2 = arith.constant 0 : index
    %c0_3 = arith.constant 0 : index
    %4 = vector.load %arg2[%c0_2, %c0_3] : memref<16x24xbf16, #tpu.memory_space<vmem>>, vector<16x24xbf16>
    %c0_4 = arith.constant 0 : index
    %c0_5 = arith.constant 0 : index
    %5 = vector.load %arg3[%c0_4, %c0_5] : memref<24x32xbf16, #tpu.memory_space<vmem>>, vector<24x32xbf16>
    %cst = arith.constant dense<0.000000e+00> : vector<16x32xf32>
    %6 = tpu.matmul %4, %5, %cst {dimension_numbers = #tpu.dot_dimension_numbers<[1], [0], [0], [1], [0, 0, 1, 1], [], []>} : vector<16x24xbf16>, vector<24x32xbf16>, vector<16x32xf32> -> vector<16x32xf32>
    %7 = arith.addf %3, %6 : vector<16x32xf32>
    %c0_6 = arith.constant 0 : index
    %c0_7 = arith.constant 0 : index
    %8 = vector.load %arg11[%c0_6, %c0_7] : memref<16x32xf32, #tpu.memory_space<vmem>>, vector<16x32xf32>
    tpu.vector_store %arg11[%c0_6, %c0_7], %7 {strides = array<i32>} : memref<16x32xf32, #tpu.memory_space<vmem>>, vector<16x32xf32>,
    %c0_i32_8 = arith.constant 0 : i32
    %9 = arith.cmpi eq, %arg1, %c0_i32_8 : i32
    %10 = arith.extui %9 : i1 to i32
    %c0_i32_9 = arith.constant 0 : i32
    %11 = arith.cmpi ne, %10, %c0_i32_9 : i32
    scf.if %11 {
      %c0_10 = arith.constant 0 : index
      %c0_11 = arith.constant 0 : index
      %12 = vector.load %arg11[%c0_10, %c0_11] : memref<16x32xf32, #tpu.memory_space<vmem>>, vector<16x32xf32>
      %c0_12 = arith.constant 0 : index
      %c0_13 = arith.constant 0 : index
      %13 = vector.load %arg5[%c0_12, %c0_13] : memref<1x32xf32, #tpu.memory_space<vmem>>, vector<1x32xf32>
      %14 = vector.broadcast %13 : vector<1x32xf32> to vector<16x32xf32>
      %15 = arith.addf %12, %14 : vector<16x32xf32>
      %c0_14 = arith.constant 0 : index
      %c0_15 = arith.constant 0 : index
      %16 = vector.load %arg9[%c0_14, %c0_15] : memref<16x32xf32, #tpu.memory_space<vmem>>, vector<16x32xf32>
      tpu.vector_store %arg9[%c0_14, %c0_15], %15 {strides = array<i32>} : memref<16x32xf32, #tpu.memory_space<vmem>>, vector<16x32xf32>,
      %c0_16 = arith.constant 0 : index
      %c0_17 = arith.constant 0 : index
      %17 = vector.load %arg4[%c0_16, %c0_17] : memref<16x32xf32, #tpu.memory_space<vmem>>, vector<16x32xf32>
      %c0_18 = arith.constant 0 : index
      %c0_19 = arith.constant 0 : index
      %18 = vector.load %arg6[%c0_18, %c0_19] : memref<32x32xf32, #tpu.memory_space<vmem>>, vector<32x32xf32>
      %cst_20 = arith.constant dense<0.000000e+00> : vector<16x32xf32>
      %19 = tpu.matmul %17, %18, %cst_20 {dimension_numbers = #tpu.dot_dimension_numbers<[1], [0], [0], [1], [0, 0, 1, 1], [], []>} : vector<16x32xf32>, vector<32x32xf32>, vector<16x32xf32> -> vector<16x32xf32>
      %c0_21 = arith.constant 0 : index
      %c0_22 = arith.constant 0 : index
      %20 = vector.load %arg7[%c0_21, %c0_22] : memref<32x32xf32, #tpu.memory_space<vmem>>, vector<32x32xf32>
      %cst_23 = arith.constant dense<0.000000e+00> : vector<16x32xf32>
      %21 = tpu.matmul %15, %20, %cst_23 {dimension_numbers = #tpu.dot_dimension_numbers<[1], [0], [0], [1], [0, 0, 1, 1], [], []>} : vector<16x32xf32>, vector<32x32xf32>, vector<16x32xf32> -> vector<16x32xf32>
      %22 = arith.addf %19, %21 : vector<16x32xf32>
      %c0_24 = arith.constant 0 : index
      %c0_25 = arith.constant 0 : index
      %23 = vector.load %arg8[%c0_24, %c0_25] : memref<1x32xf32, #tpu.memory_space<vmem>>, vector<1x32xf32>
      %24 = vector.broadcast %23 : vector<1x32xf32> to vector<16x32xf32>
      %25 = arith.addf %22, %24 : vector<16x32xf32>
      %cst_26 = arith.constant 0.000000e+00 : f32
      %26 = vector.broadcast %cst_26 : f32 to vector<16x32xf32>
      %27 = arith.maximumf %25, %26 : vector<16x32xf32>
      %c0_27 = arith.constant 0 : index
      %c0_28 = arith.constant 0 : index
      %28 = vector.load %arg10[%c0_27, %c0_28] : memref<16x32xf32, #tpu.memory_space<vmem>>, vector<16x32xf32>
      tpu.vector_store %arg10[%c0_27, %c0_28], %27 {strides = array<i32>} : memref<16x32xf32, #tpu.memory_space<vmem>>, vector<16x32xf32>,
    } else {
    }
    return
  }
  func.func @transform_0(%arg0: i32, %arg1: i32) -> (i32, i32) {
    %c0_i32 = arith.constant 0 : i32
    return %arg0, %arg1 : i32, i32
  }
  func.func @transform_1(%arg0: i32, %arg1: i32) -> (i32, i32) {
    %c0_i32 = arith.constant 0 : i32
    %c0_i32_0 = arith.constant 0 : i32
    return %arg1, %c0_i32 : i32, i32
  }
  func.func @transform_2(%arg0: i32, %arg1: i32) -> (i32, i32) {
    %c0_i32 = arith.constant 0 : i32
    %c0_i32_0 = arith.constant 0 : i32
    return %arg0, %c0_i32 : i32, i32
  }
  func.func @transform_3(%arg0: i32, %arg1: i32) -> (i32, i32) {
    %c0_i32 = arith.constant 0 : i32
    %c0_i32_0 = arith.constant 0 : i32
    %c0_i32_1 = arith.constant 0 : i32
    return %c0_i32, %c0_i32_0 : i32, i32
  }
  func.func @transform_4(%arg0: i32, %arg1: i32) -> (i32, i32) {
    %c0_i32 = arith.constant 0 : i32
    %c0_i32_0 = arith.constant 0 : i32
    %c0_i32_1 = arith.constant 0 : i32
    return %c0_i32, %c0_i32_0 : i32, i32
  }
  func.func @transform_5(%arg0: i32, %arg1: i32) -> (i32, i32) {
    %c0_i32 = arith.constant 0 : i32
    %c0_i32_0 = arith.constant 0 : i32
    %c0_i32_1 = arith.constant 0 : i32
    return %c0_i32, %c0_i32_0 : i32, i32
  }
  func.func @transform_6(%arg0: i32, %arg1: i32) -> (i32, i32) {
    %c0_i32 = arith.constant 0 : i32
    %c0_i32_0 = arith.constant 0 : i32
    %c0_i32_1 = arith.constant 0 : i32
    return %c0_i32, %c0_i32_0 : i32, i32
  }
  func.func @transform_7(%arg0: i32, %arg1: i32) -> (i32, i32) {
    %c0_i32 = arith.constant 0 : i32
    %c0_i32_0 = arith.constant 0 : i32
    return %arg0, %c0_i32 : i32, i32
  }
  func.func @transform_8(%arg0: i32, %arg1: i32) -> (i32, i32) {
    %c0_i32 = arith.constant 0 : i32
    %c0_i32_0 = arith.constant 0 : i32
    return %arg0, %c0_i32 : i32, i32
  }
}

module attributes {stable_mosaic.version = 11 : i64} {
  func.func @_odd_side_kernel(%arg0: i32, %arg1: i32, %arg2: memref<16x24xbf16, #tpu.memory_space<vmem>>, %arg3: memref<24x64xbf16, #tpu.memory_space<vmem>>, %arg4: memref<16x32xf32, #tpu.memory_space<vmem>>, %arg5: memref<1x64xf32, #tpu.memory_space<vmem>>, %arg6: memref<32x32xf32, #tpu.memory_space<vmem>>, %arg7: memref<64x32xf32, #tpu.memory_space<vmem>>, %arg8: memref<1x32xf32, #tpu.memory_space<vmem>>, %arg9: memref<16x32xf32, #tpu.memory_space<vmem>>, %arg10: memref<16x64xf32, #tpu.memory_space<vmem>>) attributes {dimension_semantics = [#tpu.dimension_semantics<parallel>, #tpu.dimension_semantics<arbitrary>], iteration_bounds = array<i64: 1, 1>, scalar_prefetch = 0 : i64, scratch_operands = 1 : i64, tpu.core_type = #tpu.core_type<tc>, window_params = [{transform_indices = @transform_0, window_bounds = array<i64: 16, 24>}, {transform_indices = @transform_1, window_bounds = array<i64: 24, 64>}, {transform_indices = @transform_2, window_bounds = array<i64: 16, 32>}, {pipeline_mode = #tpu.pipeline_mode<synchronous>, transform_indices = @transform_3, window_bounds = array<i64: 1, 64>}, {pipeline_mode = #tpu.pipeline_mode<synchronous>, transform_indices = @transform_4, window_bounds = array<i64: 32, 32>}, {pipeline_mode = #tpu.pipeline_mode<synchronous>, transform_indices = @transform_5, window_bounds = array<i64: 64, 32>}, {pipeline_mode = #tpu.pipeline_mode<synchronous>, transform_indices = @transform_6, window_bounds = array<i64: 1, 32>}, {transform_indices = @transform_7, window_bounds = array<i64: 16, 32>}]} {
    %c0_i32 = arith.constant 0 : i32
    %0 = arith.cmpi eq, %arg1, %c0_i32 : i32
    %1 = arith.extui %0 : i1 to i32
    %c0_i32_0 = arith.constant 0 : i32
    %2 = arith.cmpi ne, %1, %c0_i32_0 : i32
    scf.if %2 {
      %cst_10 = arith.constant 0.000000e+00 : f32
      %12 = vector.broadcast %cst_10 : f32 to vector<16x64xf32>
      %c0_11 = arith.constant 0 : index
      %c0_12 = arith.constant 0 : index
      %13 = vector.load %arg10[%c0_11, %c0_12] : memref<16x64xf32, #tpu.memory_space<vmem>>, vector<16x64xf32>
      tpu.vector_store %arg10[%c0_11, %c0_12], %12 {strides = array<i32>} : memref<16x64xf32, #tpu.memory_space<vmem>>, vector<16x64xf32>,
    } else {
    }
    %c0 = arith.constant 0 : index
    %c0_1 = arith.constant 0 : index
    %3 = vector.load %arg10[%c0, %c0_1] : memref<16x64xf32, #tpu.memory_space<vmem>>, vector<16x64xf32>
    %c0_2 = arith.constant 0 : index
    %c0_3 = arith.constant 0 : index
    %4 = vector.load %arg2[%c0_2, %c0_3] : memref<16x24xbf16, #tpu.memory_space<vmem>>, vector<16x24xbf16>
    %c0_4 = arith.constant 0 : index
    %c0_5 = arith.constant 0 : index
    %5 = vector.load %arg3[%c0_4, %c0_5] : memref<24x64xbf16, #tpu.memory_space<vmem>>, vector<24x64xbf16>
    %cst = arith.constant dense<0.000000e+00> : vector<16x64xf32>
    %6 = tpu.matmul %4, %5, %cst {dimension_numbers = #tpu.dot_dimension_numbers<[1], [0], [0], [1], [0, 0, 1, 1], [], []>} : vector<16x24xbf16>, vector<24x64xbf16>, vector<16x64xf32> -> vector<16x64xf32>
    %7 = arith.addf %3, %6 : vector<16x64xf32>
    %c0_6 = arith.constant 0 : index
    %c0_7 = arith.constant 0 : index
    %8 = vector.load %arg10[%c0_6, %c0_7] : memref<16x64xf32, #tpu.memory_space<vmem>>, vector<16x64xf32>
    tpu.vector_store %arg10[%c0_6, %c0_7], %7 {strides = array<i32>} : memref<16x64xf32, #tpu.memory_space<vmem>>, vector<16x64xf32>,
    %c0_i32_8 = arith.constant 0 : i32
    %9 = arith.cmpi eq, %arg1, %c0_i32_8 : i32
    %10 = arith.extui %9 : i1 to i32
    %c0_i32_9 = arith.constant 0 : i32
    %11 = arith.cmpi ne, %10, %c0_i32_9 : i32
    scf.if %11 {
      %c0_10 = arith.constant 0 : index
      %c0_11 = arith.constant 0 : index
      %12 = vector.load %arg10[%c0_10, %c0_11] : memref<16x64xf32, #tpu.memory_space<vmem>>, vector<16x64xf32>
      %c0_12 = arith.constant 0 : index
      %c0_13 = arith.constant 0 : index
      %13 = vector.load %arg5[%c0_12, %c0_13] : memref<1x64xf32, #tpu.memory_space<vmem>>, vector<1x64xf32>
      %14 = vector.broadcast %13 : vector<1x64xf32> to vector<16x64xf32>
      %15 = arith.addf %12, %14 : vector<16x64xf32>
      %c0_14 = arith.constant 0 : index
      %c0_15 = arith.constant 0 : index
      %16 = vector.load %arg4[%c0_14, %c0_15] : memref<16x32xf32, #tpu.memory_space<vmem>>, vector<16x32xf32>
      %c0_16 = arith.constant 0 : index
      %c0_17 = arith.constant 0 : index
      %17 = vector.load %arg6[%c0_16, %c0_17] : memref<32x32xf32, #tpu.memory_space<vmem>>, vector<32x32xf32>
      %cst_18 = arith.constant dense<0.000000e+00> : vector<16x32xf32>
      %18 = tpu.matmul %16, %17, %cst_18 {dimension_numbers = #tpu.dot_dimension_numbers<[1], [0], [0], [1], [0, 0, 1, 1], [], []>} : vector<16x32xf32>, vector<32x32xf32>, vector<16x32xf32> -> vector<16x32xf32>
      %c0_19 = arith.constant 0 : index
      %c0_20 = arith.constant 0 : index
      %19 = vector.load %arg7[%c0_19, %c0_20] : memref<64x32xf32, #tpu.memory_space<vmem>>, vector<64x32xf32>
      %cst_21 = arith.constant dense<0.000000e+00> : vector<16x32xf32>
      %20 = tpu.matmul %15, %19, %cst_21 {dimension_numbers = #tpu.dot_dimension_numbers<[1], [0], [0], [1], [0, 0, 1, 1], [], []>} : vector<16x64xf32>, vector<64x32xf32>, vector<16x32xf32> -> vector<16x32xf32>
      %21 = arith.addf %18, %20 : vector<16x32xf32>
      %c0_22 = arith.constant 0 : index
      %c0_23 = arith.constant 0 : index
      %22 = vector.load %arg8[%c0_22, %c0_23] : memref<1x32xf32, #tpu.memory_space<vmem>>, vector<1x32xf32>
      %23 = vector.broadcast %22 : vector<1x32xf32> to vector<16x32xf32>
      %24 = arith.addf %21, %23 : vector<16x32xf32>
      %cst_24 = arith.constant 0.000000e+00 : f32
      %25 = vector.broadcast %cst_24 : f32 to vector<16x32xf32>
      %26 = arith.maximumf %24, %25 : vector<16x32xf32>
      %c0_25 = arith.constant 0 : index
      %c0_26 = arith.constant 0 : index
      %27 = vector.load %arg9[%c0_25, %c0_26] : memref<16x32xf32, #tpu.memory_space<vmem>>, vector<16x32xf32>
      tpu.vector_store %arg9[%c0_25, %c0_26], %26 {strides = array<i32>} : memref<16x32xf32, #tpu.memory_space<vmem>>, vector<16x32xf32>,
    } else {
    }
    return
  }
  func.func @transform_0(%arg0: i32, %arg1: i32) -> (i32, i32) {
    %c0_i32 = arith.constant 0 : i32
    return %arg0, %arg1 : i32, i32
  }
  func.func @transform_1(%arg0: i32, %arg1: i32) -> (i32, i32) {
    %c0_i32 = arith.constant 0 : i32
    %c0_i32_0 = arith.constant 0 : i32
    return %arg1, %c0_i32 : i32, i32
  }
  func.func @transform_2(%arg0: i32, %arg1: i32) -> (i32, i32) {
    %c0_i32 = arith.constant 0 : i32
    %c0_i32_0 = arith.constant 0 : i32
    return %arg0, %c0_i32 : i32, i32
  }
  func.func @transform_3(%arg0: i32, %arg1: i32) -> (i32, i32) {
    %c0_i32 = arith.constant 0 : i32
    %c0_i32_0 = arith.constant 0 : i32
    %c0_i32_1 = arith.constant 0 : i32
    return %c0_i32, %c0_i32_0 : i32, i32
  }
  func.func @transform_4(%arg0: i32, %arg1: i32) -> (i32, i32) {
    %c0_i32 = arith.constant 0 : i32
    %c0_i32_0 = arith.constant 0 : i32
    %c0_i32_1 = arith.constant 0 : i32
    return %c0_i32, %c0_i32_0 : i32, i32
  }
  func.func @transform_5(%arg0: i32, %arg1: i32) -> (i32, i32) {
    %c0_i32 = arith.constant 0 : i32
    %c0_i32_0 = arith.constant 0 : i32
    %c0_i32_1 = arith.constant 0 : i32
    return %c0_i32, %c0_i32_0 : i32, i32
  }
  func.func @transform_6(%arg0: i32, %arg1: i32) -> (i32, i32) {
    %c0_i32 = arith.constant 0 : i32
    %c0_i32_0 = arith.constant 0 : i32
    %c0_i32_1 = arith.constant 0 : i32
    return %c0_i32, %c0_i32_0 : i32, i32
  }
  func.func @transform_7(%arg0: i32, %arg1: i32) -> (i32, i32) {
    %c0_i32 = arith.constant 0 : i32
    %c0_i32_0 = arith.constant 0 : i32
    return %arg0, %c0_i32 : i32, i32
  }
}

module attributes {stable_mosaic.version = 11 : i64} {
  func.func @_odd_side_kernel(%arg0: i32, %arg1: i32, %arg2: memref<24x16xbf16, #tpu.memory_space<vmem>>, %arg3: memref<16x64xbf16, #tpu.memory_space<vmem>>, %arg4: memref<24x32xf32, #tpu.memory_space<vmem>>, %arg5: memref<1x64xf32, #tpu.memory_space<vmem>>, %arg6: memref<32x32xf32, #tpu.memory_space<vmem>>, %arg7: memref<64x32xf32, #tpu.memory_space<vmem>>, %arg8: memref<1x32xf32, #tpu.memory_space<vmem>>, %arg9: memref<24x32xf32, #tpu.memory_space<vmem>>, %arg10: memref<24x64xf32, #tpu.memory_space<vmem>>) attributes {dimension_semantics = [#tpu.dimension_semantics<parallel>, #tpu.dimension_semantics<arbitrary>], iteration_bounds = array<i64: 1, 1>, scalar_prefetch = 0 : i64, scratch_operands = 1 : i64, tpu.core_type = #tpu.core_type<tc>, window_params = [{transform_indices = @transform_0, window_bounds = array<i64: 24, 16>}, {transform_indices = @transform_1, window_bounds = array<i64: 16, 64>}, {transform_indices = @transform_2, window_bounds = array<i64: 24, 32>}, {pipeline_mode = #tpu.pipeline_mode<synchronous>, transform_indices = @transform_3, window_bounds = array<i64: 1, 64>}, {pipeline_mode = #tpu.pipeline_mode<synchronous>, transform_indices = @transform_4, window_bounds = array<i64: 32, 32>}, {pipeline_mode = #tpu.pipeline_mode<synchronous>, transform_indices = @transform_5, window_bounds = array<i64: 64, 32>}, {pipeline_mode = #tpu.pipeline_mode<synchronous>, transform_indices = @transform_6, window_bounds = array<i64: 1, 32>}, {transform_indices = @transform_7, window_bounds = array<i64: 24, 32>}]} {
    %c0_i32 = arith.constant 0 : i32
    %0 = arith.cmpi eq, %arg1, %c0_i32 : i32
    %1 = arith.extui %0 : i1 to i32
    %c0_i32_0 = arith.constant 0 : i32
    %2 = arith.cmpi ne, %1, %c0_i32_0 : i32
    scf.if %2 {
      %cst_10 = arith.constant 0.000000e+00 : f32
      %12 = vector.broadcast %cst_10 : f32 to vector<24x64xf32>
      %c0_11 = arith.constant 0 : index
      %c0_12 = arith.constant 0 : index
      %13 = vector.load %arg10[%c0_11, %c0_12] : memref<24x64xf32, #tpu.memory_space<vmem>>, vector<24x64xf32>
      tpu.vector_store %arg10[%c0_11, %c0_12], %12 {strides = array<i32>} : memref<24x64xf32, #tpu.memory_space<vmem>>, vector<24x64xf32>,
    } else {
    }
    %c0 = arith.constant 0 : index
    %c0_1 = arith.constant 0 : index
    %3 = vector.load %arg10[%c0, %c0_1] : memref<24x64xf32, #tpu.memory_space<vmem>>, vector<24x64xf32>
    %c0_2 = arith.constant 0 : index
    %c0_3 = arith.constant 0 : index
    %4 = vector.load %arg2[%c0_2, %c0_3] : memref<24x16xbf16, #tpu.memory_space<vmem>>, vector<24x16xbf16>
    %c0_4 = arith.constant 0 : index
    %c0_5 = arith.constant 0 : index
    %5 = vector.load %arg3[%c0_4, %c0_5] : memref<16x64xbf16, #tpu.memory_space<vmem>>, vector<16x64xbf16>
    %cst = arith.constant dense<0.000000e+00> : vector<24x64xf32>
    %6 = tpu.matmul %4, %5, %cst {dimension_numbers = #tpu.dot_dimension_numbers<[1], [0], [0], [1], [0, 0, 1, 1], [], []>} : vector<24x16xbf16>, vector<16x64xbf16>, vector<24x64xf32> -> vector<24x64xf32>
    %7 = arith.addf %3, %6 : vector<24x64xf32>
    %c0_6 = arith.constant 0 : index
    %c0_7 = arith.constant 0 : index
    %8 = vector.load %arg10[%c0_6, %c0_7] : memref<24x64xf32, #tpu.memory_space<vmem>>, vector<24x64xf32>
    tpu.vector_store %arg10[%c0_6, %c0_7], %7 {strides = array<i32>} : memref<24x64xf32, #tpu.memory_space<vmem>>, vector<24x64xf32>,
    %c0_i32_8 = arith.constant 0 : i32
    %9 = arith.cmpi eq, %arg1, %c0_i32_8 : i32
    %10 = arith.extui %9 : i1 to i32
    %c0_i32_9 = arith.constant 0 : i32
    %11 = arith.cmpi ne, %10, %c0_i32_9 : i32
    scf.if %11 {
      %c0_10 = arith.constant 0 : index
      %c0_11 = arith.constant 0 : index
      %12 = vector.load %arg10[%c0_10, %c0_11] : memref<24x64xf32, #tpu.memory_space<vmem>>, vector<24x64xf32>
      %c0_12 = arith.constant 0 : index
      %c0_13 = arith.constant 0 : index
      %13 = vector.load %arg5[%c0_12, %c0_13] : memref<1x64xf32, #tpu.memory_space<vmem>>, vector<1x64xf32>
      %14 = vector.broadcast %13 : vector<1x64xf32> to vector<24x64xf32>
      %15 = arith.addf %12, %14 : vector<24x64xf32>
      %c0_14 = arith.constant 0 : index
      %c0_15 = arith.constant 0 : index
      %16 = vector.load %arg4[%c0_14, %c0_15] : memref<24x32xf32, #tpu.memory_space<vmem>>, vector<24x32xf32>
      %c0_16 = arith.constant 0 : index
      %c0_17 = arith.constant 0 : index
      %17 = vector.load %arg6[%c0_16, %c0_17] : memref<32x32xf32, #tpu.memory_space<vmem>>, vector<32x32xf32>
      %cst_18 = arith.constant dense<0.000000e+00> : vector<24x32xf32>
      %18 = tpu.matmul %16, %17, %cst_18 {dimension_numbers = #tpu.dot_dimension_numbers<[1], [0], [0], [1], [0, 0, 1, 1], [], []>} : vector<24x32xf32>, vector<32x32xf32>, vector<24x32xf32> -> vector<24x32xf32>
      %c0_19 = arith.constant 0 : index
      %c0_20 = arith.constant 0 : index
      %19 = vector.load %arg7[%c0_19, %c0_20] : memref<64x32xf32, #tpu.memory_space<vmem>>, vector<64x32xf32>
      %cst_21 = arith.constant dense<0.000000e+00> : vector<24x32xf32>
      %20 = tpu.matmul %15, %19, %cst_21 {dimension_numbers = #tpu.dot_dimension_numbers<[1], [0], [0], [1], [0, 0, 1, 1], [], []>} : vector<24x64xf32>, vector<64x32xf32>, vector<24x32xf32> -> vector<24x32xf32>
      %21 = arith.addf %18, %20 : vector<24x32xf32>
      %c0_22 = arith.constant 0 : index
      %c0_23 = arith.constant 0 : index
      %22 = vector.load %arg8[%c0_22, %c0_23] : memref<1x32xf32, #tpu.memory_space<vmem>>, vector<1x32xf32>
      %23 = vector.broadcast %22 : vector<1x32xf32> to vector<24x32xf32>
      %24 = arith.addf %21, %23 : vector<24x32xf32>
      %cst_24 = arith.constant 0.000000e+00 : f32
      %25 = vector.broadcast %cst_24 : f32 to vector<24x32xf32>
      %26 = arith.maximumf %24, %25 : vector<24x32xf32>
      %c0_25 = arith.constant 0 : index
      %c0_26 = arith.constant 0 : index
      %27 = vector.load %arg9[%c0_25, %c0_26] : memref<24x32xf32, #tpu.memory_space<vmem>>, vector<24x32xf32>
      tpu.vector_store %arg9[%c0_25, %c0_26], %26 {strides = array<i32>} : memref<24x32xf32, #tpu.memory_space<vmem>>, vector<24x32xf32>,
    } else {
    }
    return
  }
  func.func @transform_0(%arg0: i32, %arg1: i32) -> (i32, i32) {
    %c0_i32 = arith.constant 0 : i32
    return %arg0, %arg1 : i32, i32
  }
  func.func @transform_1(%arg0: i32, %arg1: i32) -> (i32, i32) {
    %c0_i32 = arith.constant 0 : i32
    %c0_i32_0 = arith.constant 0 : i32
    return %arg1, %c0_i32 : i32, i32
  }
  func.func @transform_2(%arg0: i32, %arg1: i32) -> (i32, i32) {
    %c0_i32 = arith.constant 0 : i32
    %c0_i32_0 = arith.constant 0 : i32
    return %arg0, %c0_i32 : i32, i32
  }
  func.func @transform_3(%arg0: i32, %arg1: i32) -> (i32, i32) {
    %c0_i32 = arith.constant 0 : i32
    %c0_i32_0 = arith.constant 0 : i32
    %c0_i32_1 = arith.constant 0 : i32
    return %c0_i32, %c0_i32_0 : i32, i32
  }
  func.func @transform_4(%arg0: i32, %arg1: i32) -> (i32, i32) {
    %c0_i32 = arith.constant 0 : i32
    %c0_i32_0 = arith.constant 0 : i32
    %c0_i32_1 = arith.constant 0 : i32
    return %c0_i32, %c0_i32_0 : i32, i32
  }
  func.func @transform_5(%arg0: i32, %arg1: i32) -> (i32, i32) {
    %c0_i32 = arith.constant 0 : i32
    %c0_i32_0 = arith.constant 0 : i32
    %c0_i32_1 = arith.constant 0 : i32
    return %c0_i32, %c0_i32_0 : i32, i32
  }
  func.func @transform_6(%arg0: i32, %arg1: i32) -> (i32, i32) {
    %c0_i32 = arith.constant 0 : i32
    %c0_i32_0 = arith.constant 0 : i32
    %c0_i32_1 = arith.constant 0 : i32
    return %c0_i32, %c0_i32_0 : i32, i32
  }
  func.func @transform_7(%arg0: i32, %arg1: i32) -> (i32, i32) {
    %c0_i32 = arith.constant 0 : i32
    %c0_i32_0 = arith.constant 0 : i32
    return %arg0, %c0_i32 : i32, i32
  }
}

</mosaic_0001>

<llo_original>
// kernel: _lambda_.5
$region0: #{_lambda_.5}
  #allocation0 [shape = 'u32[]', space=smem, size = 0x4, offset = 0x4, fixed_abs, tag = 'smem constant byte address 0x4 - core index']
  #allocation1 [shape = 'u32[144,128]{1,0:T(1,128)}', space=vmem, size = 0x12000, scoped, tag = 'internal scratch']
  #allocation2 [shape = 'f32[24,32]{1,0:T(8,128)}', space=vmem, size = 0x3000, scoped, tag = 'scratch operand']
  %s0 = inlined_call_operand.vmem [shape: bf16[24,16], index: 0, kind: input, shape index: {}]
  %s1 = inlined_call_operand.vmem [shape: bf16[16,32], index: 1, kind: input, shape index: {}]
  %s2 = inlined_call_operand.vmem [shape: f32[24,32], index: 2, kind: input, shape index: {}]
  %s3 = inlined_call_operand.vmem [shape: f32[1,32], index: 3, kind: input, shape index: {}]
  %s4 = inlined_call_operand.vmem [shape: f32[32,32], index: 4, kind: input, shape index: {}]
  %s5 = inlined_call_operand.vmem [shape: f32[32,32], index: 5, kind: input, shape index: {}]
  %s6 = inlined_call_operand.vmem [shape: f32[1,32], index: 6, kind: input, shape index: {}]
  %s7 = inlined_call_operand.vmem [shape: f32[24,32], index: 7, kind: output, shape index: {0}]
  %s8 = inlined_call_operand.vmem [shape: f32[24,32], index: 8, kind: output, shape index: {1}]
  %9 = xla_tuple %s7, %s8
  %s10 = sld [smem:[#allocation0]]
  $region54: #{_lambda_.5} parent=0
    _
  %s12 = ssub.s32 1, %s10
  %s13 = scalar_select 0, %s12, %s10
  // Predicated region
  $region2: #{_lambda_.5} parent=0 // pred_check
    _
  $region3: #{_lambda_.5} parent=0 // pred_check_branch
    %15 = sbr.rel (0) target = $region5
  $region4: #{_lambda_.5} parent=0 // pred_region
    _
  $region5: #{_lambda_.5} parent=0 // pred_fallthru
    _
  // Predicated region
  $region6: #{_lambda_.5} parent=0 // pred_check
    _
  $region7: #{_lambda_.5} parent=0 // pred_check_branch
    %17 = sbr.rel (0) target = $region9
  $region8: #{_lambda_.5} parent=0 // pred_region
    _
  $region9: #{_lambda_.5} parent=0 // pred_fallthru
    _
  // Predicated region
  $region10: #{_lambda_.5} parent=0 // pred_check
    _
  $region11: #{_lambda_.5} parent=0 // pred_check_branch
    %19 = sbr.rel (0) target = $region13
  $region12: #{_lambda_.5} parent=0 // pred_region
    _
  $region13: #{_lambda_.5} parent=0 // pred_fallthru
    _
  // Predicated region
  $region14: #{_lambda_.5} parent=0 // pred_check
    _
  $region15: #{_lambda_.5} parent=0 // pred_check_branch
    %21 = sbr.rel (0) target = $region17
  $region16: #{_lambda_.5} parent=0 // pred_region
    _
  $region17: #{_lambda_.5} parent=0 // pred_fallthru
    _
  // Predicated region
  $region18: #{_lambda_.5} parent=0 // pred_check
    _
  $region19: #{_lambda_.5} parent=0 // pred_check_branch
    %23 = sbr.rel (0) target = $region21
  $region20: #{_lambda_.5} parent=0 // pred_region
    _
  $region21: #{_lambda_.5} parent=0 // pred_fallthru
    _
  // Predicated region
  $region22: #{_lambda_.5} parent=0 // pred_check
    _
  $region23: #{_lambda_.5} parent=0 // pred_check_branch
    %25 = sbr.rel (0) target = $region25
  $region24: #{_lambda_.5} parent=0 // pred_region
    _
  $region25: #{_lambda_.5} parent=0 // pred_fallthru
    _
  // Predicated region
  $region26: #{_lambda_.5} parent=0 // pred_check
    _
  $region27: #{_lambda_.5} parent=0 // pred_check_branch
    %27 = sbr.rel (0) target = $region29
  $region28: #{_lambda_.5} parent=0 // pred_region
    _
  $region29: #{_lambda_.5} parent=0 // pred_fallthru
    _
  %p29 = scmp.eq.s32.totalorder 0, 0
  // Predicated region
  $region30: #{_lambda_.5} parent=0 // pred_check
    %p30 = pneg %p29
  $region31: #{_lambda_.5} parent=0 // pred_check_branch
    %32 = sbr.rel (%p30) target = $region33
  $region32: #{_lambda_.5} parent=0 // pred_region
    %vm33 = vcmask 261120
    %34 = vst.msk [vmem:[#allocation2] sm:$0xff] %vm33, 0.0
    %35 = vst.msk [vmem:[#allocation2 + $0x8] sm:$0xff] %vm33, 0.0
    %36 = vst.msk [vmem:[#allocation2 + $0x10] sm:$0xff] %vm33, 0.0
  $region33: #{_lambda_.5} parent=0 // pred_fallthru
    _
  %v37 = vld [vmem:[#allocation2] sm:$0xff]
  %v38 = vld [vmem:[#allocation2 + $0x8] sm:$0xff]
  %v39 = vld [vmem:[#allocation2 + $0x10] sm:$0xff]
  %v40 = vld [vmem:[%s0] sm:$0xf]
  %v41 = vld [vmem:[%s0 + $0x4] sm:$0xf]
  %v42 = vld [vmem:[%s0 + $0x8] sm:$0xf]
  %v43 = vld [vmem:[%s1] sm:$0xf]
  %v44 = vld [vmem:[%s1 + $0x4] sm:$0xf]
  %v48 = vunpack.c.l.b16 %v40
  %v49 = vunpack.c.l.b16 %v41
  %v50 = vunpack.c.l.b16 %v42
  %v51 = vpack.c.b16 %v49, %v48
  %v52 = vpack.c.b16 %v50, %v50
  %v55 = vunpack.c.l.b16 %v43
  %v56 = vunpack.c.l.b16 %v44
  %v57 = vpack.c.b16 %v56, %v55
  %vm59 = vcmask 130048
  %v61 = vsel %vm59, %v51, 0
  %v64 = vsel %vm59, %v52, 0
  %66 = vmatprep.subr.bf16.mxu0 0
  %67 = vmatpush1.bf16.msra.mxu0 %v57
  %68 = vmatprep.subr.bf16.mxu0 0
  %69 = vmatpush1.bf16.msra.mxu0 0
  %70 = vmatprep.subr.bf16.mxu0 0
  %71 = vmatpush1.bf16.msra.mxu0 0
  %72 = vmatprep.subr.bf16.mxu0 0
  %73 = vmatpush1.bf16.msra.mxu0 0
  %74 = vmatprep.subr.bf16.mxu0 0
  %75 = vmatpush1.bf16.msra.mxu0 0
  %76 = vmatprep.subr.bf16.mxu0 0
  %77 = vmatpush1.bf16.msra.mxu0 0
  %78 = vmatprep.subr.bf16.mxu0 0
  %79 = vmatpush1.bf16.msra.mxu0 0
  %80 = vmatprep.subr.bf16.mxu0 0
  %81 = vmatpush1.bf16.msra.mxu0 0
  %82 = vmatprep.subr.bf16.mxu0 0
  %83 = vmatpush1.bf16.msra.mxu0 0
  %84 = vmatprep.subr.bf16.mxu0 0
  %85 = vmatpush1.bf16.msra.mxu0 0
  %86 = vmatprep.subr.bf16.mxu0 0
  %87 = vmatpush1.bf16.msra.mxu0 0
  %88 = vmatprep.subr.bf16.mxu0 0
  %89 = vmatpush1.bf16.msra.mxu0 0
  %90 = vmatprep.subr.bf16.mxu0 0
  %91 = vmatpush1.bf16.msra.mxu0 0
  %92 = vmatprep.subr.bf16.mxu0 0
  %93 = vmatpush1.bf16.msra.mxu0 0
  %94 = vmatprep.subr.bf16.mxu0 0
  %95 = vmatpush1.bf16.msra.mxu0 0
  %96 = vmatprep.subr.bf16.mxu0 0
  %97 = vmatpush1.bf16.msra.mxu0 0
  %98 = vmatprep.mubr.bf16.mxu0 0
  %99 = vmatmul.mubr.bf16.gmra.mrb[0].mxu0 %v61
  %v100 = vpop.f32.mrb[0].mxu0
  %v101 = vadd.f32 0.0, %v100
  %v102 = vpop.f32.mrb[0].mxu0
  %v103 = vpop.f32.mrb[0].mxu0
  %v104 = vadd.f32 0.0, %v103
  %v105 = vpop.f32.mrb[0].mxu0
  %106 = vmatprep.mubr.bf16.mxu0 0
  %107 = vmatmul.mubr.bf16.gmra.mrb[0].mxu0 %v64
  %v108 = vpop.f32.mrb[0].mxu0
  %v109 = vadd.f32 0.0, %v108
  %v110 = vpop.f32.mrb[0].mxu0
  %v111 = vpop.f32.mrb[0].mxu0
  %v112 = vpop.f32.mrb[0].mxu0
  %113 = vdwg.mxu0
  %v114 = vadd.f32 %v37, %v101
  %v115 = vadd.f32 %v38, %v104
  %v116 = vadd.f32 %v39, %v109
  %vm117 = vcmask 261120
  %118 = vst.msk [vmem:[#allocation2] sm:$0xff] %vm117, %v114
  %119 = vst.msk [vmem:[#allocation2 + $0x8] sm:$0xff] %vm117, %v115
  %120 = vst.msk [vmem:[#allocation2 + $0x10] sm:$0xff] %vm117, %v116
  // Predicated region
  $region34: #{_lambda_.5} parent=0 // pred_check
    %p121 = pneg %p29
  $region35: #{_lambda_.5} parent=0 // pred_check_branch
    %123 = sbr.rel (%p121) target = $region37
  $region36: #{_lambda_.5} parent=0 // pred_region
    %v124 = vld [vmem:[#allocation2] sm:$0xff]
    %v125 = vld [vmem:[#allocation2 + $0x8] sm:$0xff]
    %v126 = vld [vmem:[#allocation2 + $0x10] sm:$0xff]
    %v127 = vld [vmem:[%s3] sm:$0x1]
    %v129 = vlaneseq
    %v130 = vshrl.u32 %v129, 7
    %v131 = vsub.s32 0, %v130
    %v132 = vrot.slane %v127, %v131
    %v134 = vadd.f32 %v124, %v132
    %v135 = vadd.f32 %v125, %v132
    %v136 = vadd.f32 %v126, %v132
    %137 = vst.msk [vmem:[%s7] sm:$0xff] %vm117, %v134
    %138 = vst.msk [vmem:[%s7 + $0x8] sm:$0xff] %vm117, %v135
    %139 = vst.msk [vmem:[%s7 + $0x10] sm:$0xff] %vm117, %v136
    %v140 = vld [vmem:[%s2] sm:$0xff]
    %v141 = vld [vmem:[%s2 + $0x8] sm:$0xff]
    %v142 = vld [vmem:[%s2 + $0x10] sm:$0xff]
    %v143 = vld [vmem:[%s4] sm:$0xff]
    %v144 = vld [vmem:[%s4 + $0x8] sm:$0xff]
    %v145 = vld [vmem:[%s4 + $0x10] sm:$0xff]
    %v146 = vld [vmem:[%s4 + $0x18] sm:$0xff]
    %v147 = vld [vmem:[%s5] sm:$0xff]
    %v148 = vld [vmem:[%s5 + $0x8] sm:$0xff]
    %v149 = vld [vmem:[%s5 + $0x10] sm:$0xff]
    %v150 = vld [vmem:[%s5 + $0x18] sm:$0xff]
    %v152 = vsel %vm117, %v134, 0
    %v155 = vsel %vm117, %v135, 0
    %v158 = vsel %vm117, %v136, 0
    %160 = vmatprep.subr.mxu0 0.0
    %161 = vmatpush1.msra.mxu0 %v147
    %162 = vmatprep.subr.mxu0 0.0
    %163 = vmatpush1.msra.mxu0 %v148
    %164 = vmatprep.subr.mxu0 0.0
    %165 = vmatpush1.msra.mxu0 %v149
    %166 = vmatprep.subr.mxu0 0.0
    %167 = vmatpush1.msra.mxu0 %v150
    %168 = vmatprep.subr.mxu0 0.0
    %169 = vmatpush1.msra.mxu0 0.0
    %170 = vmatprep.subr.mxu0 0.0
    %171 = vmatpush1.msra.mxu0 0.0
    %172 = vmatprep.subr.mxu0 0.0
    %173 = vmatpush1.msra.mxu0 0.0
    %174 = vmatprep.subr.mxu0 0.0
    %175 = vmatpush1.msra.mxu0 0.0
    %176 = vmatprep.subr.mxu0 0.0
    %177 = vmatpush1.msra.mxu0 0.0
    %178 = vmatprep.subr.mxu0 0.0
    %179 = vmatpush1.msra.mxu0 0.0
    %180 = vmatprep.subr.mxu0 0.0
    %181 = vmatpush1.msra.mxu0 0.0
    %182 = vmatprep.subr.mxu0 0.0
    %183 = vmatpush1.msra.mxu0 0.0
    %184 = vmatprep.subr.mxu0 0.0
    %185 = vmatpush1.msra.mxu0 0.0
    %186 = vmatprep.subr.mxu0 0.0
    %187 = vmatpush1.msra.mxu0 0.0
    %188 = vmatprep.subr.mxu0 0.0
    %189 = vmatpush1.msra.mxu0 0.0
    %190 = vmatprep.subr.mxu0 0.0
    %191 = vmatpush1.msra.mxu0 0.0
    %192 = vmatprep.subr.mxu0 0.0
    %193 = vmatpush1.msra.mxu0 0.0
    %194 = vmatprep.subr.mxu0 0.0
    %195 = vmatpush1.msra.mxu0 0.0
    %196 = vmatprep.subr.mxu0 0.0
    %197 = vmatpush1.msra.mxu0 0.0
    %198 = vmatprep.subr.mxu0 0.0
    %199 = vmatpush1.msra.mxu0 0.0
    %200 = vmatprep.subr.mxu0 0.0
    %201 = vmatpush1.msra.mxu0 0.0
    %202 = vmatprep.subr.mxu0 0.0
    %203 = vmatpush1.msra.mxu0 0.0
    %204 = vmatprep.subr.mxu0 0.0
    %205 = vmatpush1.msra.mxu0 0.0
    %206 = vmatprep.subr.mxu0 0.0
    %207 = vmatpush1.msra.mxu0 0.0
    %208 = vmatprep.subr.mxu0 0.0
    %209 = vmatpush1.msra.mxu0 0.0
    %210 = vmatprep.subr.mxu0 0.0
    %211 = vmatpush1.msra.mxu0 0.0
    %212 = vmatprep.subr.mxu0 0.0
    %213 = vmatpush1.msra.mxu0 0.0
    %214 = vmatprep.subr.mxu0 0.0
    %215 = vmatpush1.msra.mxu0 0.0
    %216 = vmatprep.subr.mxu0 0.0
    %217 = vmatpush1.msra.mxu0 0.0
    %218 = vmatprep.subr.mxu0 0.0
    %219 = vmatpush1.msra.mxu0 0.0
    %220 = vmatprep.subr.mxu0 0.0
    %221 = vmatpush1.msra.mxu0 0.0
    %222 = vmatprep.subr.mxu0 0.0
    %223 = vmatpush1.msra.mxu0 0.0
    %224 = vmatprep.mubr.f32.mxu0 0.0
    %225 = vmatmul.mubr.f32.gmra.mrb[0].mxu0 %v152
    %v226 = vpop.f32.mrb[0].mxu0
    %v227 = vadd.f32 0.0, %v226
    %v228 = vpop.f32.mrb[0].mxu0
    %229 = vmatprep.mubr.f32.mxu0 0.0
    %230 = vmatmul.mubr.f32.gmra.mrb[0].mxu0 %v155
    %v231 = vpop.f32.mrb[0].mxu0
    %v232 = vadd.f32 0.0, %v231
    %v233 = vpop.f32.mrb[0].mxu0
    %234 = vmatprep.mubr.f32.mxu0 0.0
    %235 = vmatmul.mubr.f32.gmra.mrb[0].mxu0 %v158
    %v236 = vpop.f32.mrb[0].mxu0
    %v237 = vadd.f32 0.0, %v236
    %v238 = vpop.f32.mrb[0].mxu0
    %239 = vdwg.mxu0
    %v241 = vsel %vm117, %v140, 0
    %v244 = vsel %vm117, %v141, 0
    %v247 = vsel %vm117, %v142, 0
    %249 = vmatprep.subr.mxu0 0.0
    %250 = vmatpush1.msra.mxu0 %v143
    %251 = vmatprep.subr.mxu0 0.0
    %252 = vmatpush1.msra.mxu0 %v144
    %253 = vmatprep.subr.mxu0 0.0
    %254 = vmatpush1.msra.mxu0 %v145
    %255 = vmatprep.subr.mxu0 0.0
    %256 = vmatpush1.msra.mxu0 %v146
    %257 = vmatprep.subr.mxu0 0.0
    %258 = vmatpush1.msra.mxu0 0.0
    %259 = vmatprep.subr.mxu0 0.0
    %260 = vmatpush1.msra.mxu0 0.0
    %261 = vmatprep.subr.mxu0 0.0
    %262 = vmatpush1.msra.mxu0 0.0
    %263 = vmatprep.subr.mxu0 0.0
    %264 = vmatpush1.msra.mxu0 0.0
    %265 = vmatprep.subr.mxu0 0.0
    %266 = vmatpush1.msra.mxu0 0.0
    %267 = vmatprep.subr.mxu0 0.0
    %268 = vmatpush1.msra.mxu0 0.0
    %269 = vmatprep.subr.mxu0 0.0
    %270 = vmatpush1.msra.mxu0 0.0
    %271 = vmatprep.subr.mxu0 0.0
    %272 = vmatpush1.msra.mxu0 0.0
    %273 = vmatprep.subr.mxu0 0.0
    %274 = vmatpush1.msra.mxu0 0.0
    %275 = vmatprep.subr.mxu0 0.0
    %276 = vmatpush1.msra.mxu0 0.0
    %277 = vmatprep.subr.mxu0 0.0
    %278 = vmatpush1.msra.mxu0 0.0
    %279 = vmatprep.subr.mxu0 0.0
    %280 = vmatpush1.msra.mxu0 0.0
    %281 = vmatprep.subr.mxu0 0.0
    %282 = vmatpush1.msra.mxu0 0.0
    %283 = vmatprep.subr.mxu0 0.0
    %284 = vmatpush1.msra.mxu0 0.0
    %285 = vmatprep.subr.mxu0 0.0
    %286 = vmatpush1.msra.mxu0 0.0
    %287 = vmatprep.subr.mxu0 0.0
    %288 = vmatpush1.msra.mxu0 0.0
    %289 = vmatprep.subr.mxu0 0.0
    %290 = vmatpush1.msra.mxu0 0.0
    %291 = vmatprep.subr.mxu0 0.0
    %292 = vmatpush1.msra.mxu0 0.0
    %293 = vmatprep.subr.mxu0 0.0
    %294 = vmatpush1.msra.mxu0 0.0
    %295 = vmatprep.subr.mxu0 0.0
    %296 = vmatpush1.msra.mxu0 0.0
    %297 = vmatprep.subr.mxu0 0.0
    %298 = vmatpush1.msra.mxu0 0.0
    %299 = vmatprep.subr.mxu0 0.0
    %300 = vmatpush1.msra.mxu0 0.0
    %301 = vmatprep.subr.mxu0 0.0
    %302 = vmatpush1.msra.mxu0 0.0
    %303 = vmatprep.subr.mxu0 0.0
    %304 = vmatpush1.msra.mxu0 0.0
    %305 = vmatprep.subr.mxu0 0.0
    %306 = vmatpush1.msra.mxu0 0.0
    %307 = vmatprep.subr.mxu0 0.0
    %308 = vmatpush1.msra.mxu0 0.0
    %309 = vmatprep.subr.mxu0 0.0
    %310 = vmatpush1.msra.mxu0 0.0
    %311 = vmatprep.subr.mxu0 0.0
    %312 = vmatpush1.msra.mxu0 0.0
    %313 = vmatprep.mubr.f32.mxu0 0.0
    %314 = vmatmul.mubr.f32.gmra.mrb[0].mxu0 %v241
    %v315 = vpop.f32.mrb[0].mxu0
    %v316 = vadd.f32 %v227, %v315
    %v317 = vpop.f32.mrb[0].mxu0
    %318 = vmatprep.mubr.f32.mxu0 0.0
    %319 = vmatmul.mubr.f32.gmra.mrb[0].mxu0 %v244
    %v320 = vpop.f32.mrb[0].mxu0
    %v321 = vadd.f32 %v232, %v320
    %v322 = vpop.f32.mrb[0].mxu0
    %323 = vmatprep.mubr.f32.mxu0 0.0
    %324 = vmatmul.mubr.f32.gmra.mrb[0].mxu0 %v247
    %v325 = vpop.f32.mrb[0].mxu0
    %v326 = vadd.f32 %v237, %v325
    %v327 = vpop.f32.mrb[0].mxu0
    %328 = vdwg.mxu0
    %v329 = vld [vmem:[%s6] sm:$0x1]
    %v331 = vlaneseq
    %v332 = vshrl.u32 %v331, 7
    %v333 = vsub.s32 0, %v332
    %v334 = vrot.slane %v329, %v333
    %v336 = vadd.f32 %v316, %v334
    %v337 = vadd.f32 %v321, %v334
    %v338 = vadd.f32 %v326, %v334
    %v339 = vmax.f32 %v336, 0.0
    %v340 = vmax.f32 %v337, 0.0
    %v341 = vmax.f32 %v338, 0.0
    %342 = vst.msk [vmem:[%s8] sm:$0xff] %vm117, %v339
    %343 = vst.msk [vmem:[%s8 + $0x8] sm:$0xff] %vm117, %v340
    %344 = vst.msk [vmem:[%s8 + $0x10] sm:$0xff] %vm117, %v341
  $region37: #{_lambda_.5} parent=0 // pred_fallthru
    _
  // Predicated region
  $region38: #{_lambda_.5} parent=0 // pred_check
    _
  $region39: #{_lambda_.5} parent=0 // pred_check_branch
    %346 = sbr.rel (0) target = $region41
  $region40: #{_lambda_.5} parent=0 // pred_region
    _
  $region41: #{_lambda_.5} parent=0 // pred_fallthru
    _
  // Predicated region
  $region42: #{_lambda_.5} parent=0 // pred_check
    _
  $region43: #{_lambda_.5} parent=0 // pred_check_branch
    %348 = sbr.rel (0) target = $region45
  $region44: #{_lambda_.5} parent=0 // pred_region
    _
  $region45: #{_lambda_.5} parent=0 // pred_fallthru
    _
  // Predicated region
  $region46: #{_lambda_.5} parent=0 // pred_check
    _
  $region47: #{_lambda_.5} parent=0 // pred_check_branch
    %350 = sbr.rel (0) target = $region49
  $region48: #{_lambda_.5} parent=0 // pred_region
    _
  $region49: #{_lambda_.5} parent=0 // pred_fallthru
    _
  // Predicated region
  $region50: #{_lambda_.5} parent=0 // pred_check
    _
  $region51: #{_lambda_.5} parent=0 // pred_check_branch
    %352 = sbr.rel (0) target = $region53
  $region52: #{_lambda_.5} parent=0 // pred_region
    _
  $region53: #{_lambda_.5} parent=0 // pred_fallthru
    _

// kernel: _lambda_.6
$region0: #{_lambda_.6}
  #allocation0 [shape = 'u32[]', space=smem, size = 0x4, offset = 0x4, fixed_abs, tag = 'smem constant byte address 0x4 - core index']
  #allocation1 [shape = 'u32[144,128]{1,0:T(1,128)}', space=vmem, size = 0x12000, scoped, tag = 'internal scratch']
  #allocation2 [shape = 'f32[16,64]{1,0:T(8,128)}', space=vmem, size = 0x2000, scoped, tag = 'scratch operand']
  %s0 = inlined_call_operand.vmem [shape: bf16[16,24], index: 0, kind: input, shape index: {}]
  %s1 = inlined_call_operand.vmem [shape: bf16[24,64], index: 1, kind: input, shape index: {}]
  %s2 = inlined_call_operand.vmem [shape: f32[16,32], index: 2, kind: input, shape index: {}]
  %s3 = inlined_call_operand.vmem [shape: f32[1,64], index: 3, kind: input, shape index: {}]
  %s4 = inlined_call_operand.vmem [shape: f32[32,32], index: 4, kind: input, shape index: {}]
  %s5 = inlined_call_operand.vmem [shape: f32[64,32], index: 5, kind: input, shape index: {}]
  %s6 = inlined_call_operand.vmem [shape: f32[1,32], index: 6, kind: input, shape index: {}]
  %s7 = inlined_call_operand.vmem [shape: f32[16,32], index: 7, kind: output, shape index: {}]
  %s8 = sld [smem:[#allocation0]]
  $region46: #{_lambda_.6} parent=0
    _
  %s10 = ssub.s32 1, %s8
  %s11 = scalar_select 0, %s10, %s8
  // Predicated region
  $region2: #{_lambda_.6} parent=0 // pred_check
    _
  $region3: #{_lambda_.6} parent=0 // pred_check_branch
    %13 = sbr.rel (0) target = $region5
  $region4: #{_lambda_.6} parent=0 // pred_region
    _
  $region5: #{_lambda_.6} parent=0 // pred_fallthru
    _
  // Predicated region
  $region6: #{_lambda_.6} parent=0 // pred_check
    _
  $region7: #{_lambda_.6} parent=0 // pred_check_branch
    %15 = sbr.rel (0) target = $region9
  $region8: #{_lambda_.6} parent=0 // pred_region
    _
  $region9: #{_lambda_.6} parent=0 // pred_fallthru
    _
  // Predicated region
  $region10: #{_lambda_.6} parent=0 // pred_check
    _
  $region11: #{_lambda_.6} parent=0 // pred_check_branch
    %17 = sbr.rel (0) target = $region13
  $region12: #{_lambda_.6} parent=0 // pred_region
    _
  $region13: #{_lambda_.6} parent=0 // pred_fallthru
    _
  // Predicated region
  $region14: #{_lambda_.6} parent=0 // pred_check
    _
  $region15: #{_lambda_.6} parent=0 // pred_check_branch
    %19 = sbr.rel (0) target = $region17
  $region16: #{_lambda_.6} parent=0 // pred_region
    _
  $region17: #{_lambda_.6} parent=0 // pred_fallthru
    _
  // Predicated region
  $region18: #{_lambda_.6} parent=0 // pred_check
    _
  $region19: #{_lambda_.6} parent=0 // pred_check_branch
    %21 = sbr.rel (0) target = $region21
  $region20: #{_lambda_.6} parent=0 // pred_region
    _
  $region21: #{_lambda_.6} parent=0 // pred_fallthru
    _
  // Predicated region
  $region22: #{_lambda_.6} parent=0 // pred_check
    _
  $region23: #{_lambda_.6} parent=0 // pred_check_branch
    %23 = sbr.rel (0) target = $region25
  $region24: #{_lambda_.6} parent=0 // pred_region
    _
  $region25: #{_lambda_.6} parent=0 // pred_fallthru
    _
  // Predicated region
  $region26: #{_lambda_.6} parent=0 // pred_check
    _
  $region27: #{_lambda_.6} parent=0 // pred_check_branch
    %25 = sbr.rel (0) target = $region29
  $region28: #{_lambda_.6} parent=0 // pred_region
    _
  $region29: #{_lambda_.6} parent=0 // pred_fallthru
    _
  %p27 = scmp.eq.s32.totalorder 0, 0
  // Predicated region
  $region30: #{_lambda_.6} parent=0 // pred_check
    %p28 = pneg %p27
  $region31: #{_lambda_.6} parent=0 // pred_check_branch
    %30 = sbr.rel (%p28) target = $region33
  $region32: #{_lambda_.6} parent=0 // pred_region
    %vm31 = vcmask 523264
    %32 = vst.msk [vmem:[#allocation2] sm:$0xff] %vm31, 0.0
    %33 = vst.msk [vmem:[#allocation2 + $0x8] sm:$0xff] %vm31, 0.0
  $region33: #{_lambda_.6} parent=0 // pred_fallthru
    _
  %v34 = vld [vmem:[#allocation2] sm:$0xff]
  %v35 = vld [vmem:[#allocation2 + $0x8] sm:$0xff]
  %v36 = vld [vmem:[%s0] sm:$0xf]
  %v37 = vld [vmem:[%s0 + $0x4] sm:$0xf]
  %v38 = vld [vmem:[%s1] sm:$0xf]
  %v39 = vld [vmem:[%s1 + $0x4] sm:$0xf]
  %v40 = vld [vmem:[%s1 + $0x8] sm:$0xf]
  %v43 = vunpack.c.l.b16 %v36
  %v44 = vunpack.c.l.b16 %v37
  %v45 = vpack.c.b16 %v44, %v43
  %v49 = vunpack.c.l.b16 %v38
  %v50 = vunpack.c.l.b16 %v39
  %v51 = vunpack.c.l.b16 %v40
  %v52 = vpack.c.b16 %v50, %v49
  %v53 = vpack.c.b16 %v51, %v51
  %vm55 = vcmask 195584
  %v57 = vsel %vm55, %v45, 0
  %vm59 = vcmask 1043456
  %v61 = vsel %vm59, %v53, 0
  %63 = vmatprep.subr.bf16.mxu0 0
  %64 = vmatpush1.bf16.msra.mxu0 %v52
  %65 = vmatprep.subr.bf16.mxu0 0
  %66 = vmatpush1.bf16.msra.mxu0 %v61
  %67 = vmatprep.subr.bf16.mxu0 0
  %68 = vmatpush1.bf16.msra.mxu0 0
  %69 = vmatprep.subr.bf16.mxu0 0
  %70 = vmatpush1.bf16.msra.mxu0 0
  %71 = vmatprep.subr.bf16.mxu0 0
  %72 = vmatpush1.bf16.msra.mxu0 0
  %73 = vmatprep.subr.bf16.mxu0 0
  %74 = vmatpush1.bf16.msra.mxu0 0
  %75 = vmatprep.subr.bf16.mxu0 0
  %76 = vmatpush1.bf16.msra.mxu0 0
  %77 = vmatprep.subr.bf16.mxu0 0
  %78 = vmatpush1.bf16.msra.mxu0 0
  %79 = vmatprep.subr.bf16.mxu0 0
  %80 = vmatpush1.bf16.msra.mxu0 0
  %81 = vmatprep.subr.bf16.mxu0 0
  %82 = vmatpush1.bf16.msra.mxu0 0
  %83 = vmatprep.subr.bf16.mxu0 0
  %84 = vmatpush1.bf16.msra.mxu0 0
  %85 = vmatprep.subr.bf16.mxu0 0
  %86 = vmatpush1.bf16.msra.mxu0 0
  %87 = vmatprep.subr.bf16.mxu0 0
  %88 = vmatpush1.bf16.msra.mxu0 0
  %89 = vmatprep.subr.bf16.mxu0 0
  %90 = vmatpush1.bf16.msra.mxu0 0
  %91 = vmatprep.subr.bf16.mxu0 0
  %92 = vmatpush1.bf16.msra.mxu0 0
  %93 = vmatprep.subr.bf16.mxu0 0
  %94 = vmatpush1.bf16.msra.mxu0 0
  %95 = vmatprep.mubr.bf16.mxu0 0
  %96 = vmatmul.mubr.bf16.gmra.mrb[0].mxu0 %v57
  %v97 = vpop.f32.mrb[0].mxu0
  %v98 = vadd.f32 0.0, %v97
  %v99 = vpop.f32.mrb[0].mxu0
  %v100 = vpop.f32.mrb[0].mxu0
  %v101 = vadd.f32 0.0, %v100
  %v102 = vpop.f32.mrb[0].mxu0
  %103 = vdwg.mxu0
  %v104 = vadd.f32 %v34, %v98
  %v105 = vadd.f32 %v35, %v101
  %vm106 = vcmask 523264
  %107 = vst.msk [vmem:[#allocation2] sm:$0xff] %vm106, %v104
  %108 = vst.msk [vmem:[#allocation2 + $0x8] sm:$0xff] %vm106, %v105
  // Predicated region
  $region34: #{_lambda_.6} parent=0 // pred_check
    %p109 = pneg %p27
  $region35: #{_lambda_.6} parent=0 // pred_check_branch
    %111 = sbr.rel (%p109) target = $region37
  $region36: #{_lambda_.6} parent=0 // pred_region
    %v112 = vld [vmem:[#allocation2] sm:$0xff]
    %v113 = vld [vmem:[#allocation2 + $0x8] sm:$0xff]
    %v114 = vld [vmem:[%s3] sm:$0x1]
    %v116 = vlaneseq
    %v117 = vshrl.u32 %v116, 7
    %v118 = vsub.s32 0, %v117
    %v119 = vrot.slane %v114, %v118
    %v121 = vadd.f32 %v112, %v119
    %v122 = vadd.f32 %v113, %v119
    %v123 = vld [vmem:[%s2] sm:$0xff]
    %v124 = vld [vmem:[%s2 + $0x8] sm:$0xff]
    %v125 = vld [vmem:[%s4] sm:$0xff]
    %v126 = vld [vmem:[%s4 + $0x8] sm:$0xff]
    %v127 = vld [vmem:[%s4 + $0x10] sm:$0xff]
    %v128 = vld [vmem:[%s4 + $0x18] sm:$0xff]
    %v129 = vld [vmem:[%s5] sm:$0xff]
    %v130 = vld [vmem:[%s5 + $0x8] sm:$0xff]
    %v131 = vld [vmem:[%s5 + $0x10] sm:$0xff]
    %v132 = vld [vmem:[%s5 + $0x18] sm:$0xff]
    %v133 = vld [vmem:[%s5 + $0x20] sm:$0xff]
    %v134 = vld [vmem:[%s5 + $0x28] sm:$0xff]
    %v135 = vld [vmem:[%s5 + $0x30] sm:$0xff]
    %v136 = vld [vmem:[%s5 + $0x38] sm:$0xff]
    %v138 = vsel %vm106, %v121, 0
    %v141 = vsel %vm106, %v122, 0
    %143 = vmatprep.subr.mxu0 0.0
    %144 = vmatpush1.msra.mxu0 %v129
    %145 = vmatprep.subr.mxu0 0.0
    %146 = vmatpush1.msra.mxu0 %v130
    %147 = vmatprep.subr.mxu0 0.0
    %148 = vmatpush1.msra.mxu0 %v131
    %149 = vmatprep.subr.mxu0 0.0
    %150 = vmatpush1.msra.mxu0 %v132
    %151 = vmatprep.subr.mxu0 0.0
    %152 = vmatpush1.msra.mxu0 %v133
    %153 = vmatprep.subr.mxu0 0.0
    %154 = vmatpush1.msra.mxu0 %v134
    %155 = vmatprep.subr.mxu0 0.0
    %156 = vmatpush1.msra.mxu0 %v135
    %157 = vmatprep.subr.mxu0 0.0
    %158 = vmatpush1.msra.mxu0 %v136
    %159 = vmatprep.subr.mxu0 0.0
    %160 = vmatpush1.msra.mxu0 0.0
    %161 = vmatprep.subr.mxu0 0.0
    %162 = vmatpush1.msra.mxu0 0.0
    %163 = vmatprep.subr.mxu0 0.0
    %164 = vmatpush1.msra.mxu0 0.0
    %165 = vmatprep.subr.mxu0 0.0
    %166 = vmatpush1.msra.mxu0 0.0
    %167 = vmatprep.subr.mxu0 0.0
    %168 = vmatpush1.msra.mxu0 0.0
    %169 = vmatprep.subr.mxu0 0.0
    %170 = vmatpush1.msra.mxu0 0.0
    %171 = vmatprep.subr.mxu0 0.0
    %172 = vmatpush1.msra.mxu0 0.0
    %173 = vmatprep.subr.mxu0 0.0
    %174 = vmatpush1.msra.mxu0 0.0
    %175 = vmatprep.subr.mxu0 0.0
    %176 = vmatpush1.msra.mxu0 0.0
    %177 = vmatprep.subr.mxu0 0.0
    %178 = vmatpush1.msra.mxu0 0.0
    %179 = vmatprep.subr.mxu0 0.0
    %180 = vmatpush1.msra.mxu0 0.0
    %181 = vmatprep.subr.mxu0 0.0
    %182 = vmatpush1.msra.mxu0 0.0
    %183 = vmatprep.subr.mxu0 0.0
    %184 = vmatpush1.msra.mxu0 0.0
    %185 = vmatprep.subr.mxu0 0.0
    %186 = vmatpush1.msra.mxu0 0.0
    %187 = vmatprep.subr.mxu0 0.0
    %188 = vmatpush1.msra.mxu0 0.0
    %189 = vmatprep.subr.mxu0 0.0
    %190 = vmatpush1.msra.mxu0 0.0
    %191 = vmatprep.subr.mxu0 0.0
    %192 = vmatpush1.msra.mxu0 0.0
    %193 = vmatprep.subr.mxu0 0.0
    %194 = vmatpush1.msra.mxu0 0.0
    %195 = vmatprep.subr.mxu0 0.0
    %196 = vmatpush1.msra.mxu0 0.0
    %197 = vmatprep.subr.mxu0 0.0
    %198 = vmatpush1.msra.mxu0 0.0
    %199 = vmatprep.subr.mxu0 0.0
    %200 = vmatpush1.msra.mxu0 0.0
    %201 = vmatprep.subr.mxu0 0.0
    %202 = vmatpush1.msra.mxu0 0.0
    %203 = vmatprep.subr.mxu0 0.0
    %204 = vmatpush1.msra.mxu0 0.0
    %205 = vmatprep.subr.mxu0 0.0
    %206 = vmatpush1.msra.mxu0 0.0
    %207 = vmatprep.mubr.f32.mxu0 0.0
    %208 = vmatmul.mubr.f32.gmra.mrb[0].mxu0 %v138
    %v209 = vpop.f32.mrb[0].mxu0
    %v210 = vadd.f32 0.0, %v209
    %v211 = vpop.f32.mrb[0].mxu0
    %212 = vmatprep.mubr.f32.mxu0 0.0
    %213 = vmatmul.mubr.f32.gmra.mrb[0].mxu0 %v141
    %v214 = vpop.f32.mrb[0].mxu0
    %v215 = vadd.f32 0.0, %v214
    %v216 = vpop.f32.mrb[0].mxu0
    %217 = vdwg.mxu0
    %vm218 = vcmask 261120
    %v220 = vsel %vm218, %v123, 0
    %v223 = vsel %vm218, %v124, 0
    %225 = vmatprep.subr.mxu0 0.0
    %226 = vmatpush1.msra.mxu0 %v125
    %227 = vmatprep.subr.mxu0 0.0
    %228 = vmatpush1.msra.mxu0 %v126
    %229 = vmatprep.subr.mxu0 0.0
    %230 = vmatpush1.msra.mxu0 %v127
    %231 = vmatprep.subr.mxu0 0.0
    %232 = vmatpush1.msra.mxu0 %v128
    %233 = vmatprep.subr.mxu0 0.0
    %234 = vmatpush1.msra.mxu0 0.0
    %235 = vmatprep.subr.mxu0 0.0
    %236 = vmatpush1.msra.mxu0 0.0
    %237 = vmatprep.subr.mxu0 0.0
    %238 = vmatpush1.msra.mxu0 0.0
    %239 = vmatprep.subr.mxu0 0.0
    %240 = vmatpush1.msra.mxu0 0.0
    %241 = vmatprep.subr.mxu0 0.0
    %242 = vmatpush1.msra.mxu0 0.0
    %243 = vmatprep.subr.mxu0 0.0
    %244 = vmatpush1.msra.mxu0 0.0
    %245 = vmatprep.subr.mxu0 0.0
    %246 = vmatpush1.msra.mxu0 0.0
    %247 = vmatprep.subr.mxu0 0.0
    %248 = vmatpush1.msra.mxu0 0.0
    %249 = vmatprep.subr.mxu0 0.0
    %250 = vmatpush1.msra.mxu0 0.0
    %251 = vmatprep.subr.mxu0 0.0
    %252 = vmatpush1.msra.mxu0 0.0
    %253 = vmatprep.subr.mxu0 0.0
    %254 = vmatpush1.msra.mxu0 0.0
    %255 = vmatprep.subr.mxu0 0.0
    %256 = vmatpush1.msra.mxu0 0.0
    %257 = vmatprep.subr.mxu0 0.0
    %258 = vmatpush1.msra.mxu0 0.0
    %259 = vmatprep.subr.mxu0 0.0
    %260 = vmatpush1.msra.mxu0 0.0
    %261 = vmatprep.subr.mxu0 0.0
    %262 = vmatpush1.msra.mxu0 0.0
    %263 = vmatprep.subr.mxu0 0.0
    %264 = vmatpush1.msra.mxu0 0.0
    %265 = vmatprep.subr.mxu0 0.0
    %266 = vmatpush1.msra.mxu0 0.0
    %267 = vmatprep.subr.mxu0 0.0
    %268 = vmatpush1.msra.mxu0 0.0
    %269 = vmatprep.subr.mxu0 0.0
    %270 = vmatpush1.msra.mxu0 0.0
    %271 = vmatprep.subr.mxu0 0.0
    %272 = vmatpush1.msra.mxu0 0.0
    %273 = vmatprep.subr.mxu0 0.0
    %274 = vmatpush1.msra.mxu0 0.0
    %275 = vmatprep.subr.mxu0 0.0
    %276 = vmatpush1.msra.mxu0 0.0
    %277 = vmatprep.subr.mxu0 0.0
    %278 = vmatpush1.msra.mxu0 0.0
    %279 = vmatprep.subr.mxu0 0.0
    %280 = vmatpush1.msra.mxu0 0.0
    %281 = vmatprep.subr.mxu0 0.0
    %282 = vmatpush1.msra.mxu0 0.0
    %283 = vmatprep.subr.mxu0 0.0
    %284 = vmatpush1.msra.mxu0 0.0
    %285 = vmatprep.subr.mxu0 0.0
    %286 = vmatpush1.msra.mxu0 0.0
    %287 = vmatprep.subr.mxu0 0.0
    %288 = vmatpush1.msra.mxu0 0.0
    %289 = vmatprep.mubr.f32.mxu0 0.0
    %290 = vmatmul.mubr.f32.gmra.mrb[0].mxu0 %v220
    %v291 = vpop.f32.mrb[0].mxu0
    %v292 = vadd.f32 %v210, %v291
    %v293 = vpop.f32.mrb[0].mxu0
    %294 = vmatprep.mubr.f32.mxu0 0.0
    %295 = vmatmul.mubr.f32.gmra.mrb[0].mxu0 %v223
    %v296 = vpop.f32.mrb[0].mxu0
    %v297 = vadd.f32 %v215, %v296
    %v298 = vpop.f32.mrb[0].mxu0
    %299 = vdwg.mxu0
    %v300 = vld [vmem:[%s6] sm:$0x1]
    %v302 = vlaneseq
    %v303 = vshrl.u32 %v302, 7
    %v304 = vsub.s32 0, %v303
    %v305 = vrot.slane %v300, %v304
    %v307 = vadd.f32 %v292, %v305
    %v308 = vadd.f32 %v297, %v305
    %v309 = vmax.f32 %v307, 0.0
    %v310 = vmax.f32 %v308, 0.0
    %311 = vst.msk [vmem:[%s7] sm:$0xff] %vm218, %v309
    %312 = vst.msk [vmem:[%s7 + $0x8] sm:$0xff] %vm218, %v310
  $region37: #{_lambda_.6} parent=0 // pred_fallthru
    _
  // Predicated region
  $region38: #{_lambda_.6} parent=0 // pred_check
    _
  $region39: #{_lambda_.6} parent=0 // pred_check_branch
    %314 = sbr.rel (0) target = $region41
  $region40: #{_lambda_.6} parent=0 // pred_region
    _
  $region41: #{_lambda_.6} parent=0 // pred_fallthru
    _
  // Predicated region
  $region42: #{_lambda_.6} parent=0 // pred_check
    _
  $region43: #{_lambda_.6} parent=0 // pred_check_branch
    %316 = sbr.rel (0) target = $region45
  $region44: #{_lambda_.6} parent=0 // pred_region
    _
  $region45: #{_lambda_.6} parent=0 // pred_fallthru
    _

// kernel: _lambda_.4
$region0: #{_lambda_.4}
  #allocation0 [shape = 'u32[]', space=smem, size = 0x4, offset = 0x4, fixed_abs, tag = 'smem constant byte address 0x4 - core index']
  #allocation1 [shape = 'u32[144,128]{1,0:T(1,128)}', space=vmem, size = 0x12000, scoped, tag = 'internal scratch']
  #allocation2 [shape = 'f32[16,32]{1,0:T(8,128)}', space=vmem, size = 0x2000, scoped, tag = 'scratch operand']
  %s0 = inlined_call_operand.vmem [shape: bf16[16,24], index: 0, kind: input, shape index: {}]
  %s1 = inlined_call_operand.vmem [shape: bf16[24,32], index: 1, kind: input, shape index: {}]
  %s2 = inlined_call_operand.vmem [shape: f32[16,32], index: 2, kind: input, shape index: {}]
  %s3 = inlined_call_operand.vmem [shape: f32[1,32], index: 3, kind: input, shape index: {}]
  %s4 = inlined_call_operand.vmem [shape: f32[32,32], index: 4, kind: input, shape index: {}]
  %s5 = inlined_call_operand.vmem [shape: f32[32,32], index: 5, kind: input, shape index: {}]
  %s6 = inlined_call_operand.vmem [shape: f32[1,32], index: 6, kind: input, shape index: {}]
  %s7 = inlined_call_operand.vmem [shape: f32[16,32], index: 7, kind: output, shape index: {0}]
  %s8 = inlined_call_operand.vmem [shape: f32[16,32], index: 8, kind: output, shape index: {1}]
  %9 = xla_tuple %s7, %s8
  %s10 = sld [smem:[#allocation0]]
  $region54: #{_lambda_.4} parent=0
    _
  %s12 = ssub.s32 1, %s10
  %s13 = scalar_select 0, %s12, %s10
  // Predicated region
  $region2: #{_lambda_.4} parent=0 // pred_check
    _
  $region3: #{_lambda_.4} parent=0 // pred_check_branch
    %15 = sbr.rel (0) target = $region5
  $region4: #{_lambda_.4} parent=0 // pred_region
    _
  $region5: #{_lambda_.4} parent=0 // pred_fallthru
    _
  // Predicated region
  $region6: #{_lambda_.4} parent=0 // pred_check
    _
  $region7: #{_lambda_.4} parent=0 // pred_check_branch
    %17 = sbr.rel (0) target = $region9
  $region8: #{_lambda_.4} parent=0 // pred_region
    _
  $region9: #{_lambda_.4} parent=0 // pred_fallthru
    _
  // Predicated region
  $region10: #{_lambda_.4} parent=0 // pred_check
    _
  $region11: #{_lambda_.4} parent=0 // pred_check_branch
    %19 = sbr.rel (0) target = $region13
  $region12: #{_lambda_.4} parent=0 // pred_region
    _
  $region13: #{_lambda_.4} parent=0 // pred_fallthru
    _
  // Predicated region
  $region14: #{_lambda_.4} parent=0 // pred_check
    _
  $region15: #{_lambda_.4} parent=0 // pred_check_branch
    %21 = sbr.rel (0) target = $region17
  $region16: #{_lambda_.4} parent=0 // pred_region
    _
  $region17: #{_lambda_.4} parent=0 // pred_fallthru
    _
  // Predicated region
  $region18: #{_lambda_.4} parent=0 // pred_check
    _
  $region19: #{_lambda_.4} parent=0 // pred_check_branch
    %23 = sbr.rel (0) target = $region21
  $region20: #{_lambda_.4} parent=0 // pred_region
    _
  $region21: #{_lambda_.4} parent=0 // pred_fallthru
    _
  // Predicated region
  $region22: #{_lambda_.4} parent=0 // pred_check
    _
  $region23: #{_lambda_.4} parent=0 // pred_check_branch
    %25 = sbr.rel (0) target = $region25
  $region24: #{_lambda_.4} parent=0 // pred_region
    _
  $region25: #{_lambda_.4} parent=0 // pred_fallthru
    _
  // Predicated region
  $region26: #{_lambda_.4} parent=0 // pred_check
    _
  $region27: #{_lambda_.4} parent=0 // pred_check_branch
    %27 = sbr.rel (0) target = $region29
  $region28: #{_lambda_.4} parent=0 // pred_region
    _
  $region29: #{_lambda_.4} parent=0 // pred_fallthru
    _
  %p29 = scmp.eq.s32.totalorder 0, 0
  // Predicated region
  $region30: #{_lambda_.4} parent=0 // pred_check
    %p30 = pneg %p29
  $region31: #{_lambda_.4} parent=0 // pred_check_branch
    %32 = sbr.rel (%p30) target = $region33
  $region32: #{_lambda_.4} parent=0 // pred_region
    %vm33 = vcmask 261120
    %34 = vst.msk [vmem:[#allocation2] sm:$0xff] %vm33, 0.0
    %35 = vst.msk [vmem:[#allocation2 + $0x8] sm:$0xff] %vm33, 0.0
  $region33: #{_lambda_.4} parent=0 // pred_fallthru
    _
  %v36 = vld [vmem:[#allocation2] sm:$0xff]
  %v37 = vld [vmem:[#allocation2 + $0x8] sm:$0xff]
  %v38 = vld [vmem:[%s0] sm:$0xf]
  %v39 = vld [vmem:[%s0 + $0x4] sm:$0xf]
  %v40 = vld [vmem:[%s1] sm:$0xf]
  %v41 = vld [vmem:[%s1 + $0x4] sm:$0xf]
  %v42 = vld [vmem:[%s1 + $0x8] sm:$0xf]
  %v45 = vunpack.c.l.b16 %v38
  %v46 = vunpack.c.l.b16 %v39
  %v47 = vpack.c.b16 %v46, %v45
  %v51 = vunpack.c.l.b16 %v40
  %v52 = vunpack.c.l.b16 %v41
  %v53 = vunpack.c.l.b16 %v42
  %v54 = vpack.c.b16 %v52, %v51
  %v55 = vpack.c.b16 %v53, %v53
  %vm57 = vcmask 195584
  %v59 = vsel %vm57, %v47, 0
  %vm61 = vcmask 1043456
  %v63 = vsel %vm61, %v55, 0
  %65 = vmatprep.subr.bf16.mxu0 0
  %66 = vmatpush1.bf16.msra.mxu0 %v54
  %67 = vmatprep.subr.bf16.mxu0 0
  %68 = vmatpush1.bf16.msra.mxu0 %v63
  %69 = vmatprep.subr.bf16.mxu0 0
  %70 = vmatpush1.bf16.msra.mxu0 0
  %71 = vmatprep.subr.bf16.mxu0 0
  %72 = vmatpush1.bf16.msra.mxu0 0
  %73 = vmatprep.subr.bf16.mxu0 0
  %74 = vmatpush1.bf16.msra.mxu0 0
  %75 = vmatprep.subr.bf16.mxu0 0
  %76 = vmatpush1.bf16.msra.mxu0 0
  %77 = vmatprep.subr.bf16.mxu0 0
  %78 = vmatpush1.bf16.msra.mxu0 0
  %79 = vmatprep.subr.bf16.mxu0 0
  %80 = vmatpush1.bf16.msra.mxu0 0
  %81 = vmatprep.subr.bf16.mxu0 0
  %82 = vmatpush1.bf16.msra.mxu0 0
  %83 = vmatprep.subr.bf16.mxu0 0
  %84 = vmatpush1.bf16.msra.mxu0 0
  %85 = vmatprep.subr.bf16.mxu0 0
  %86 = vmatpush1.bf16.msra.mxu0 0
  %87 = vmatprep.subr.bf16.mxu0 0
  %88 = vmatpush1.bf16.msra.mxu0 0
  %89 = vmatprep.subr.bf16.mxu0 0
  %90 = vmatpush1.bf16.msra.mxu0 0
  %91 = vmatprep.subr.bf16.mxu0 0
  %92 = vmatpush1.bf16.msra.mxu0 0
  %93 = vmatprep.subr.bf16.mxu0 0
  %94 = vmatpush1.bf16.msra.mxu0 0
  %95 = vmatprep.subr.bf16.mxu0 0
  %96 = vmatpush1.bf16.msra.mxu0 0
  %97 = vmatprep.mubr.bf16.mxu0 0
  %98 = vmatmul.mubr.bf16.gmra.mrb[0].mxu0 %v59
  %v99 = vpop.f32.mrb[0].mxu0
  %v100 = vadd.f32 0.0, %v99
  %v101 = vpop.f32.mrb[0].mxu0
  %v102 = vpop.f32.mrb[0].mxu0
  %v103 = vadd.f32 0.0, %v102
  %v104 = vpop.f32.mrb[0].mxu0
  %105 = vdwg.mxu0
  %v106 = vadd.f32 %v36, %v100
  %v107 = vadd.f32 %v37, %v103
  %vm108 = vcmask 261120
  %109 = vst.msk [vmem:[#allocation2] sm:$0xff] %vm108, %v106
  %110 = vst.msk [vmem:[#allocation2 + $0x8] sm:$0xff] %vm108, %v107
  // Predicated region
  $region34: #{_lambda_.4} parent=0 // pred_check
    %p111 = pneg %p29
  $region35: #{_lambda_.4} parent=0 // pred_check_branch
    %113 = sbr.rel (%p111) target = $region37
  $region36: #{_lambda_.4} parent=0 // pred_region
    %v114 = vld [vmem:[#allocation2] sm:$0xff]
    %v115 = vld [vmem:[#allocation2 + $0x8] sm:$0xff]
    %v116 = vld [vmem:[%s3] sm:$0x1]
    %v118 = vlaneseq
    %v119 = vshrl.u32 %v118, 7
    %v120 = vsub.s32 0, %v119
    %v121 = vrot.slane %v116, %v120
    %v123 = vadd.f32 %v114, %v121
    %v124 = vadd.f32 %v115, %v121
    %125 = vst.msk [vmem:[%s7] sm:$0xff] %vm108, %v123
    %126 = vst.msk [vmem:[%s7 + $0x8] sm:$0xff] %vm108, %v124
    %v127 = vld [vmem:[%s2] sm:$0xff]
    %v128 = vld [vmem:[%s2 + $0x8] sm:$0xff]
    %v129 = vld [vmem:[%s4] sm:$0xff]
    %v130 = vld [vmem:[%s4 + $0x8] sm:$0xff]
    %v131 = vld [vmem:[%s4 + $0x10] sm:$0xff]
    %v132 = vld [vmem:[%s4 + $0x18] sm:$0xff]
    %v133 = vld [vmem:[%s5] sm:$0xff]
    %v134 = vld [vmem:[%s5 + $0x8] sm:$0xff]
    %v135 = vld [vmem:[%s5 + $0x10] sm:$0xff]
    %v136 = vld [vmem:[%s5 + $0x18] sm:$0xff]
    %v138 = vsel %vm108, %v123, 0
    %v141 = vsel %vm108, %v124, 0
    %143 = vmatprep.subr.mxu0 0.0
    %144 = vmatpush1.msra.mxu0 %v133
    %145 = vmatprep.subr.mxu0 0.0
    %146 = vmatpush1.msra.mxu0 %v134
    %147 = vmatprep.subr.mxu0 0.0
    %148 = vmatpush1.msra.mxu0 %v135
    %149 = vmatprep.subr.mxu0 0.0
    %150 = vmatpush1.msra.mxu0 %v136
    %151 = vmatprep.subr.mxu0 0.0
    %152 = vmatpush1.msra.mxu0 0.0
    %153 = vmatprep.subr.mxu0 0.0
    %154 = vmatpush1.msra.mxu0 0.0
    %155 = vmatprep.subr.mxu0 0.0
    %156 = vmatpush1.msra.mxu0 0.0
    %157 = vmatprep.subr.mxu0 0.0
    %158 = vmatpush1.msra.mxu0 0.0
    %159 = vmatprep.subr.mxu0 0.0
    %160 = vmatpush1.msra.mxu0 0.0
    %161 = vmatprep.subr.mxu0 0.0
    %162 = vmatpush1.msra.mxu0 0.0
    %163 = vmatprep.subr.mxu0 0.0
    %164 = vmatpush1.msra.mxu0 0.0
    %165 = vmatprep.subr.mxu0 0.0
    %166 = vmatpush1.msra.mxu0 0.0
    %167 = vmatprep.subr.mxu0 0.0
    %168 = vmatpush1.msra.mxu0 0.0
    %169 = vmatprep.subr.mxu0 0.0
    %170 = vmatpush1.msra.mxu0 0.0
    %171 = vmatprep.subr.mxu0 0.0
    %172 = vmatpush1.msra.mxu0 0.0
    %173 = vmatprep.subr.mxu0 0.0
    %174 = vmatpush1.msra.mxu0 0.0
    %175 = vmatprep.subr.mxu0 0.0
    %176 = vmatpush1.msra.mxu0 0.0
    %177 = vmatprep.subr.mxu0 0.0
    %178 = vmatpush1.msra.mxu0 0.0
    %179 = vmatprep.subr.mxu0 0.0
    %180 = vmatpush1.msra.mxu0 0.0
    %181 = vmatprep.subr.mxu0 0.0
    %182 = vmatpush1.msra.mxu0 0.0
    %183 = vmatprep.subr.mxu0 0.0
    %184 = vmatpush1.msra.mxu0 0.0
    %185 = vmatprep.subr.mxu0 0.0
    %186 = vmatpush1.msra.mxu0 0.0
    %187 = vmatprep.subr.mxu0 0.0
    %188 = vmatpush1.msra.mxu0 0.0
    %189 = vmatprep.subr.mxu0 0.0
    %190 = vmatpush1.msra.mxu0 0.0
    %191 = vmatprep.subr.mxu0 0.0
    %192 = vmatpush1.msra.mxu0 0.0
    %193 = vmatprep.subr.mxu0 0.0
    %194 = vmatpush1.msra.mxu0 0.0
    %195 = vmatprep.subr.mxu0 0.0
    %196 = vmatpush1.msra.mxu0 0.0
    %197 = vmatprep.subr.mxu0 0.0
    %198 = vmatpush1.msra.mxu0 0.0
    %199 = vmatprep.subr.mxu0 0.0
    %200 = vmatpush1.msra.mxu0 0.0
    %201 = vmatprep.subr.mxu0 0.0
    %202 = vmatpush1.msra.mxu0 0.0
    %203 = vmatprep.subr.mxu0 0.0
    %204 = vmatpush1.msra.mxu0 0.0
    %205 = vmatprep.subr.mxu0 0.0
    %206 = vmatpush1.msra.mxu0 0.0
    %207 = vmatprep.mubr.f32.mxu0 0.0
    %208 = vmatmul.mubr.f32.gmra.mrb[0].mxu0 %v138
    %v209 = vpop.f32.mrb[0].mxu0
    %v210 = vadd.f32 0.0, %v209
    %v211 = vpop.f32.mrb[0].mxu0
    %212 = vmatprep.mubr.f32.mxu0 0.0
    %213 = vmatmul.mubr.f32.gmra.mrb[0].mxu0 %v141
    %v214 = vpop.f32.mrb[0].mxu0
    %v215 = vadd.f32 0.0, %v214
    %v216 = vpop.f32.mrb[0].mxu0
    %217 = vdwg.mxu0
    %v219 = vsel %vm108, %v127, 0
    %v222 = vsel %vm108, %v128, 0
    %224 = vmatprep.subr.mxu0 0.0
    %225 = vmatpush1.msra.mxu0 %v129
    %226 = vmatprep.subr.mxu0 0.0
    %227 = vmatpush1.msra.mxu0 %v130
    %228 = vmatprep.subr.mxu0 0.0
    %229 = vmatpush1.msra.mxu0 %v131
    %230 = vmatprep.subr.mxu0 0.0
    %231 = vmatpush1.msra.mxu0 %v132
    %232 = vmatprep.subr.mxu0 0.0
    %233 = vmatpush1.msra.mxu0 0.0
    %234 = vmatprep.subr.mxu0 0.0
    %235 = vmatpush1.msra.mxu0 0.0
    %236 = vmatprep.subr.mxu0 0.0
    %237 = vmatpush1.msra.mxu0 0.0
    %238 = vmatprep.subr.mxu0 0.0
    %239 = vmatpush1.msra.mxu0 0.0
    %240 = vmatprep.subr.mxu0 0.0
    %241 = vmatpush1.msra.mxu0 0.0
    %242 = vmatprep.subr.mxu0 0.0
    %243 = vmatpush1.msra.mxu0 0.0
    %244 = vmatprep.subr.mxu0 0.0
    %245 = vmatpush1.msra.mxu0 0.0
    %246 = vmatprep.subr.mxu0 0.0
    %247 = vmatpush1.msra.mxu0 0.0
    %248 = vmatprep.subr.mxu0 0.0
    %249 = vmatpush1.msra.mxu0 0.0
    %250 = vmatprep.subr.mxu0 0.0
    %251 = vmatpush1.msra.mxu0 0.0
    %252 = vmatprep.subr.mxu0 0.0
    %253 = vmatpush1.msra.mxu0 0.0
    %254 = vmatprep.subr.mxu0 0.0
    %255 = vmatpush1.msra.mxu0 0.0
    %256 = vmatprep.subr.mxu0 0.0
    %257 = vmatpush1.msra.mxu0 0.0
    %258 = vmatprep.subr.mxu0 0.0
    %259 = vmatpush1.msra.mxu0 0.0
    %260 = vmatprep.subr.mxu0 0.0
    %261 = vmatpush1.msra.mxu0 0.0
    %262 = vmatprep.subr.mxu0 0.0
    %263 = vmatpush1.msra.mxu0 0.0
    %264 = vmatprep.subr.mxu0 0.0
    %265 = vmatpush1.msra.mxu0 0.0
    %266 = vmatprep.subr.mxu0 0.0
    %267 = vmatpush1.msra.mxu0 0.0
    %268 = vmatprep.subr.mxu0 0.0
    %269 = vmatpush1.msra.mxu0 0.0
    %270 = vmatprep.subr.mxu0 0.0
    %271 = vmatpush1.msra.mxu0 0.0
    %272 = vmatprep.subr.mxu0 0.0
    %273 = vmatpush1.msra.mxu0 0.0
    %274 = vmatprep.subr.mxu0 0.0
    %275 = vmatpush1.msra.mxu0 0.0
    %276 = vmatprep.subr.mxu0 0.0
    %277 = vmatpush1.msra.mxu0 0.0
    %278 = vmatprep.subr.mxu0 0.0
    %279 = vmatpush1.msra.mxu0 0.0
    %280 = vmatprep.subr.mxu0 0.0
    %281 = vmatpush1.msra.mxu0 0.0
    %282 = vmatprep.subr.mxu0 0.0
    %283 = vmatpush1.msra.mxu0 0.0
    %284 = vmatprep.subr.mxu0 0.0
    %285 = vmatpush1.msra.mxu0 0.0
    %286 = vmatprep.subr.mxu0 0.0
    %287 = vmatpush1.msra.mxu0 0.0
    %288 = vmatprep.mubr.f32.mxu0 0.0
    %289 = vmatmul.mubr.f32.gmra.mrb[0].mxu0 %v219
    %v290 = vpop.f32.mrb[0].mxu0
    %v291 = vadd.f32 %v210, %v290
    %v292 = vpop.f32.mrb[0].mxu0
    %293 = vmatprep.mubr.f32.mxu0 0.0
    %294 = vmatmul.mubr.f32.gmra.mrb[0].mxu0 %v222
    %v295 = vpop.f32.mrb[0].mxu0
    %v296 = vadd.f32 %v215, %v295
    %v297 = vpop.f32.mrb[0].mxu0
    %298 = vdwg.mxu0
    %v299 = vld [vmem:[%s6] sm:$0x1]
    %v301 = vlaneseq
    %v302 = vshrl.u32 %v301, 7
    %v303 = vsub.s32 0, %v302
    %v304 = vrot.slane %v299, %v303
    %v306 = vadd.f32 %v291, %v304
    %v307 = vadd.f32 %v296, %v304
    %v308 = vmax.f32 %v306, 0.0
    %v309 = vmax.f32 %v307, 0.0
    %310 = vst.msk [vmem:[%s8] sm:$0xff] %vm108, %v308
    %311 = vst.msk [vmem:[%s8 + $0x8] sm:$0xff] %vm108, %v309
  $region37: #{_lambda_.4} parent=0 // pred_fallthru
    _
  // Predicated region
  $region38: #{_lambda_.4} parent=0 // pred_check
    _
  $region39: #{_lambda_.4} parent=0 // pred_check_branch
    %313 = sbr.rel (0) target = $region41
  $region40: #{_lambda_.4} parent=0 // pred_region
    _
  $region41: #{_lambda_.4} parent=0 // pred_fallthru
    _
  // Predicated region
  $region42: #{_lambda_.4} parent=0 // pred_check
    _
  $region43: #{_lambda_.4} parent=0 // pred_check_branch
    %315 = sbr.rel (0) target = $region45
  $region44: #{_lambda_.4} parent=0 // pred_region
    _
  $region45: #{_lambda_.4} parent=0 // pred_fallthru
    _
  // Predicated region
  $region46: #{_lambda_.4} parent=0 // pred_check
    _
  $region47: #{_lambda_.4} parent=0 // pred_check_branch
    %317 = sbr.rel (0) target = $region49
  $region48: #{_lambda_.4} parent=0 // pred_region
    _
  $region49: #{_lambda_.4} parent=0 // pred_fallthru
    _
  // Predicated region
  $region50: #{_lambda_.4} parent=0 // pred_check
    _
  $region51: #{_lambda_.4} parent=0 // pred_check_branch
    %319 = sbr.rel (0) target = $region53
  $region52: #{_lambda_.4} parent=0 // pred_region
    _
  $region53: #{_lambda_.4} parent=0 // pred_fallthru
    _

// kernel: _lambda_.7
$region0: #{_lambda_.7}
  #allocation0 [shape = 'u32[]', space=smem, size = 0x4, offset = 0x4, fixed_abs, tag = 'smem constant byte address 0x4 - core index']
  #allocation1 [shape = 'u32[144,128]{1,0:T(1,128)}', space=vmem, size = 0x12000, scoped, tag = 'internal scratch']
  #allocation2 [shape = 'f32[24,64]{1,0:T(8,128)}', space=vmem, size = 0x3000, scoped, tag = 'scratch operand']
  %s0 = inlined_call_operand.vmem [shape: bf16[24,16], index: 0, kind: input, shape index: {}]
  %s1 = inlined_call_operand.vmem [shape: bf16[16,64], index: 1, kind: input, shape index: {}]
  %s2 = inlined_call_operand.vmem [shape: f32[24,32], index: 2, kind: input, shape index: {}]
  %s3 = inlined_call_operand.vmem [shape: f32[1,64], index: 3, kind: input, shape index: {}]
  %s4 = inlined_call_operand.vmem [shape: f32[32,32], index: 4, kind: input, shape index: {}]
  %s5 = inlined_call_operand.vmem [shape: f32[64,32], index: 5, kind: input, shape index: {}]
  %s6 = inlined_call_operand.vmem [shape: f32[1,32], index: 6, kind: input, shape index: {}]
  %s7 = inlined_call_operand.vmem [shape: f32[24,32], index: 7, kind: output, shape index: {}]
  %s8 = sld [smem:[#allocation0]]
  $region46: #{_lambda_.7} parent=0
    _
  %s10 = ssub.s32 1, %s8
  %s11 = scalar_select 0, %s10, %s8
  // Predicated region
  $region2: #{_lambda_.7} parent=0 // pred_check
    _
  $region3: #{_lambda_.7} parent=0 // pred_check_branch
    %13 = sbr.rel (0) target = $region5
  $region4: #{_lambda_.7} parent=0 // pred_region
    _
  $region5: #{_lambda_.7} parent=0 // pred_fallthru
    _
  // Predicated region
  $region6: #{_lambda_.7} parent=0 // pred_check
    _
  $region7: #{_lambda_.7} parent=0 // pred_check_branch
    %15 = sbr.rel (0) target = $region9
  $region8: #{_lambda_.7} parent=0 // pred_region
    _
  $region9: #{_lambda_.7} parent=0 // pred_fallthru
    _
  // Predicated region
  $region10: #{_lambda_.7} parent=0 // pred_check
    _
  $region11: #{_lambda_.7} parent=0 // pred_check_branch
    %17 = sbr.rel (0) target = $region13
  $region12: #{_lambda_.7} parent=0 // pred_region
    _
  $region13: #{_lambda_.7} parent=0 // pred_fallthru
    _
  // Predicated region
  $region14: #{_lambda_.7} parent=0 // pred_check
    _
  $region15: #{_lambda_.7} parent=0 // pred_check_branch
    %19 = sbr.rel (0) target = $region17
  $region16: #{_lambda_.7} parent=0 // pred_region
    _
  $region17: #{_lambda_.7} parent=0 // pred_fallthru
    _
  // Predicated region
  $region18: #{_lambda_.7} parent=0 // pred_check
    _
  $region19: #{_lambda_.7} parent=0 // pred_check_branch
    %21 = sbr.rel (0) target = $region21
  $region20: #{_lambda_.7} parent=0 // pred_region
    _
  $region21: #{_lambda_.7} parent=0 // pred_fallthru
    _
  // Predicated region
  $region22: #{_lambda_.7} parent=0 // pred_check
    _
  $region23: #{_lambda_.7} parent=0 // pred_check_branch
    %23 = sbr.rel (0) target = $region25
  $region24: #{_lambda_.7} parent=0 // pred_region
    _
  $region25: #{_lambda_.7} parent=0 // pred_fallthru
    _
  // Predicated region
  $region26: #{_lambda_.7} parent=0 // pred_check
    _
  $region27: #{_lambda_.7} parent=0 // pred_check_branch
    %25 = sbr.rel (0) target = $region29
  $region28: #{_lambda_.7} parent=0 // pred_region
    _
  $region29: #{_lambda_.7} parent=0 // pred_fallthru
    _
  %p27 = scmp.eq.s32.totalorder 0, 0
  // Predicated region
  $region30: #{_lambda_.7} parent=0 // pred_check
    %p28 = pneg %p27
  $region31: #{_lambda_.7} parent=0 // pred_check_branch
    %30 = sbr.rel (%p28) target = $region33
  $region32: #{_lambda_.7} parent=0 // pred_region
    %vm31 = vcmask 523264
    %32 = vst.msk [vmem:[#allocation2] sm:$0xff] %vm31, 0.0
    %33 = vst.msk [vmem:[#allocation2 + $0x8] sm:$0xff] %vm31, 0.0
    %34 = vst.msk [vmem:[#allocation2 + $0x10] sm:$0xff] %vm31, 0.0
  $region33: #{_lambda_.7} parent=0 // pred_fallthru
    _
  %v35 = vld [vmem:[#allocation2] sm:$0xff]
  %v36 = vld [vmem:[#allocation2 + $0x8] sm:$0xff]
  %v37 = vld [vmem:[#allocation2 + $0x10] sm:$0xff]
  %v38 = vld [vmem:[%s0] sm:$0xf]
  %v39 = vld [vmem:[%s0 + $0x4] sm:$0xf]
  %v40 = vld [vmem:[%s0 + $0x8] sm:$0xf]
  %v41 = vld [vmem:[%s1] sm:$0xf]
  %v42 = vld [vmem:[%s1 + $0x4] sm:$0xf]
  %v46 = vunpack.c.l.b16 %v38
  %v47 = vunpack.c.l.b16 %v39
  %v48 = vunpack.c.l.b16 %v40
  %v49 = vpack.c.b16 %v47, %v46
  %v50 = vpack.c.b16 %v48, %v48
  %v53 = vunpack.c.l.b16 %v41
  %v54 = vunpack.c.l.b16 %v42
  %v55 = vpack.c.b16 %v54, %v53
  %vm57 = vcmask 130048
  %v59 = vsel %vm57, %v49, 0
  %v62 = vsel %vm57, %v50, 0
  %64 = vmatprep.subr.bf16.mxu0 0
  %65 = vmatpush1.bf16.msra.mxu0 %v55
  %66 = vmatprep.subr.bf16.mxu0 0
  %67 = vmatpush1.bf16.msra.mxu0 0
  %68 = vmatprep.subr.bf16.mxu0 0
  %69 = vmatpush1.bf16.msra.mxu0 0
  %70 = vmatprep.subr.bf16.mxu0 0
  %71 = vmatpush1.bf16.msra.mxu0 0
  %72 = vmatprep.subr.bf16.mxu0 0
  %73 = vmatpush1.bf16.msra.mxu0 0
  %74 = vmatprep.subr.bf16.mxu0 0
  %75 = vmatpush1.bf16.msra.mxu0 0
  %76 = vmatprep.subr.bf16.mxu0 0
  %77 = vmatpush1.bf16.msra.mxu0 0
  %78 = vmatprep.subr.bf16.mxu0 0
  %79 = vmatpush1.bf16.msra.mxu0 0
  %80 = vmatprep.subr.bf16.mxu0 0
  %81 = vmatpush1.bf16.msra.mxu0 0
  %82 = vmatprep.subr.bf16.mxu0 0
  %83 = vmatpush1.bf16.msra.mxu0 0
  %84 = vmatprep.subr.bf16.mxu0 0
  %85 = vmatpush1.bf16.msra.mxu0 0
  %86 = vmatprep.subr.bf16.mxu0 0
  %87 = vmatpush1.bf16.msra.mxu0 0
  %88 = vmatprep.subr.bf16.mxu0 0
  %89 = vmatpush1.bf16.msra.mxu0 0
  %90 = vmatprep.subr.bf16.mxu0 0
  %91 = vmatpush1.bf16.msra.mxu0 0
  %92 = vmatprep.subr.bf16.mxu0 0
  %93 = vmatpush1.bf16.msra.mxu0 0
  %94 = vmatprep.subr.bf16.mxu0 0
  %95 = vmatpush1.bf16.msra.mxu0 0
  %96 = vmatprep.mubr.bf16.mxu0 0
  %97 = vmatmul.mubr.bf16.gmra.mrb[0].mxu0 %v59
  %v98 = vpop.f32.mrb[0].mxu0
  %v99 = vadd.f32 0.0, %v98
  %v100 = vpop.f32.mrb[0].mxu0
  %v101 = vpop.f32.mrb[0].mxu0
  %v102 = vadd.f32 0.0, %v101
  %v103 = vpop.f32.mrb[0].mxu0
  %104 = vmatprep.mubr.bf16.mxu0 0
  %105 = vmatmul.mubr.bf16.gmra.mrb[0].mxu0 %v62
  %v106 = vpop.f32.mrb[0].mxu0
  %v107 = vadd.f32 0.0, %v106
  %v108 = vpop.f32.mrb[0].mxu0
  %v109 = vpop.f32.mrb[0].mxu0
  %v110 = vpop.f32.mrb[0].mxu0
  %111 = vdwg.mxu0
  %v112 = vadd.f32 %v35, %v99
  %v113 = vadd.f32 %v36, %v102
  %v114 = vadd.f32 %v37, %v107
  %vm115 = vcmask 523264
  %116 = vst.msk [vmem:[#allocation2] sm:$0xff] %vm115, %v112
  %117 = vst.msk [vmem:[#allocation2 + $0x8] sm:$0xff] %vm115, %v113
  %118 = vst.msk [vmem:[#allocation2 + $0x10] sm:$0xff] %vm115, %v114
  // Predicated region
  $region34: #{_lambda_.7} parent=0 // pred_check
    %p119 = pneg %p27
  $region35: #{_lambda_.7} parent=0 // pred_check_branch
    %121 = sbr.rel (%p119) target = $region37
  $region36: #{_lambda_.7} parent=0 // pred_region
    %v122 = vld [vmem:[#allocation2] sm:$0xff]
    %v123 = vld [vmem:[#allocation2 + $0x8] sm:$0xff]
    %v124 = vld [vmem:[#allocation2 + $0x10] sm:$0xff]
    %v125 = vld [vmem:[%s3] sm:$0x1]
    %v127 = vlaneseq
    %v128 = vshrl.u32 %v127, 7
    %v129 = vsub.s32 0, %v128
    %v130 = vrot.slane %v125, %v129
    %v132 = vadd.f32 %v122, %v130
    %v133 = vadd.f32 %v123, %v130
    %v134 = vadd.f32 %v124, %v130
    %v135 = vld [vmem:[%s2] sm:$0xff]
    %v136 = vld [vmem:[%s2 + $0x8] sm:$0xff]
    %v137 = vld [vmem:[%s2 + $0x10] sm:$0xff]
    %v138 = vld [vmem:[%s4] sm:$0xff]
    %v139 = vld [vmem:[%s4 + $0x8] sm:$0xff]
    %v140 = vld [vmem:[%s4 + $0x10] sm:$0xff]
    %v141 = vld [vmem:[%s4 + $0x18] sm:$0xff]
    %v142 = vld [vmem:[%s5] sm:$0xff]
    %v143 = vld [vmem:[%s5 + $0x8] sm:$0xff]
    %v144 = vld [vmem:[%s5 + $0x10] sm:$0xff]
    %v145 = vld [vmem:[%s5 + $0x18] sm:$0xff]
    %v146 = vld [vmem:[%s5 + $0x20] sm:$0xff]
    %v147 = vld [vmem:[%s5 + $0x28] sm:$0xff]
    %v148 = vld [vmem:[%s5 + $0x30] sm:$0xff]
    %v149 = vld [vmem:[%s5 + $0x38] sm:$0xff]
    %v151 = vsel %vm115, %v132, 0
    %v154 = vsel %vm115, %v133, 0
    %v157 = vsel %vm115, %v134, 0
    %159 = vmatprep.subr.mxu0 0.0
    %160 = vmatpush1.msra.mxu0 %v142
    %161 = vmatprep.subr.mxu0 0.0
    %162 = vmatpush1.msra.mxu0 %v143
    %163 = vmatprep.subr.mxu0 0.0
    %164 = vmatpush1.msra.mxu0 %v144
    %165 = vmatprep.subr.mxu0 0.0
    %166 = vmatpush1.msra.mxu0 %v145
    %167 = vmatprep.subr.mxu0 0.0
    %168 = vmatpush1.msra.mxu0 %v146
    %169 = vmatprep.subr.mxu0 0.0
    %170 = vmatpush1.msra.mxu0 %v147
    %171 = vmatprep.subr.mxu0 0.0
    %172 = vmatpush1.msra.mxu0 %v148
    %173 = vmatprep.subr.mxu0 0.0
    %174 = vmatpush1.msra.mxu0 %v149
    %175 = vmatprep.subr.mxu0 0.0
    %176 = vmatpush1.msra.mxu0 0.0
    %177 = vmatprep.subr.mxu0 0.0
    %178 = vmatpush1.msra.mxu0 0.0
    %179 = vmatprep.subr.mxu0 0.0
    %180 = vmatpush1.msra.mxu0 0.0
    %181 = vmatprep.subr.mxu0 0.0
    %182 = vmatpush1.msra.mxu0 0.0
    %183 = vmatprep.subr.mxu0 0.0
    %184 = vmatpush1.msra.mxu0 0.0
    %185 = vmatprep.subr.mxu0 0.0
    %186 = vmatpush1.msra.mxu0 0.0
    %187 = vmatprep.subr.mxu0 0.0
    %188 = vmatpush1.msra.mxu0 0.0
    %189 = vmatprep.subr.mxu0 0.0
    %190 = vmatpush1.msra.mxu0 0.0
    %191 = vmatprep.subr.mxu0 0.0
    %192 = vmatpush1.msra.mxu0 0.0
    %193 = vmatprep.subr.mxu0 0.0
    %194 = vmatpush1.msra.mxu0 0.0
    %195 = vmatprep.subr.mxu0 0.0
    %196 = vmatpush1.msra.mxu0 0.0
    %197 = vmatprep.subr.mxu0 0.0
    %198 = vmatpush1.msra.mxu0 0.0
    %199 = vmatprep.subr.mxu0 0.0
    %200 = vmatpush1.msra.mxu0 0.0
    %201 = vmatprep.subr.mxu0 0.0
    %202 = vmatpush1.msra.mxu0 0.0
    %203 = vmatprep.subr.mxu0 0.0
    %204 = vmatpush1.msra.mxu0 0.0
    %205 = vmatprep.subr.mxu0 0.0
    %206 = vmatpush1.msra.mxu0 0.0
    %207 = vmatprep.subr.mxu0 0.0
    %208 = vmatpush1.msra.mxu0 0.0
    %209 = vmatprep.subr.mxu0 0.0
    %210 = vmatpush1.msra.mxu0 0.0
    %211 = vmatprep.subr.mxu0 0.0
    %212 = vmatpush1.msra.mxu0 0.0
    %213 = vmatprep.subr.mxu0 0.0
    %214 = vmatpush1.msra.mxu0 0.0
    %215 = vmatprep.subr.mxu0 0.0
    %216 = vmatpush1.msra.mxu0 0.0
    %217 = vmatprep.subr.mxu0 0.0
    %218 = vmatpush1.msra.mxu0 0.0
    %219 = vmatprep.subr.mxu0 0.0
    %220 = vmatpush1.msra.mxu0 0.0
    %221 = vmatprep.subr.mxu0 0.0
    %222 = vmatpush1.msra.mxu0 0.0
    %223 = vmatprep.mubr.f32.mxu0 0.0
    %224 = vmatmul.mubr.f32.gmra.mrb[0].mxu0 %v151
    %v225 = vpop.f32.mrb[0].mxu0
    %v226 = vadd.f32 0.0, %v225
    %v227 = vpop.f32.mrb[0].mxu0
    %228 = vmatprep.mubr.f32.mxu0 0.0
    %229 = vmatmul.mubr.f32.gmra.mrb[0].mxu0 %v154
    %v230 = vpop.f32.mrb[0].mxu0
    %v231 = vadd.f32 0.0, %v230
    %v232 = vpop.f32.mrb[0].mxu0
    %233 = vmatprep.mubr.f32.mxu0 0.0
    %234 = vmatmul.mubr.f32.gmra.mrb[0].mxu0 %v157
    %v235 = vpop.f32.mrb[0].mxu0
    %v236 = vadd.f32 0.0, %v235
    %v237 = vpop.f32.mrb[0].mxu0
    %238 = vdwg.mxu0
    %vm239 = vcmask 261120
    %v241 = vsel %vm239, %v135, 0
    %v244 = vsel %vm239, %v136, 0
    %v247 = vsel %vm239, %v137, 0
    %249 = vmatprep.subr.mxu0 0.0
    %250 = vmatpush1.msra.mxu0 %v138
    %251 = vmatprep.subr.mxu0 0.0
    %252 = vmatpush1.msra.mxu0 %v139
    %253 = vmatprep.subr.mxu0 0.0
    %254 = vmatpush1.msra.mxu0 %v140
    %255 = vmatprep.subr.mxu0 0.0
    %256 = vmatpush1.msra.mxu0 %v141
    %257 = vmatprep.subr.mxu0 0.0
    %258 = vmatpush1.msra.mxu0 0.0
    %259 = vmatprep.subr.mxu0 0.0
    %260 = vmatpush1.msra.mxu0 0.0
    %261 = vmatprep.subr.mxu0 0.0
    %262 = vmatpush1.msra.mxu0 0.0
    %263 = vmatprep.subr.mxu0 0.0
    %264 = vmatpush1.msra.mxu0 0.0
    %265 = vmatprep.subr.mxu0 0.0
    %266 = vmatpush1.msra.mxu0 0.0
    %267 = vmatprep.subr.mxu0 0.0
    %268 = vmatpush1.msra.mxu0 0.0
    %269 = vmatprep.subr.mxu0 0.0
    %270 = vmatpush1.msra.mxu0 0.0
    %271 = vmatprep.subr.mxu0 0.0
    %272 = vmatpush1.msra.mxu0 0.0
    %273 = vmatprep.subr.mxu0 0.0
    %274 = vmatpush1.msra.mxu0 0.0
    %275 = vmatprep.subr.mxu0 0.0
    %276 = vmatpush1.msra.mxu0 0.0
    %277 = vmatprep.subr.mxu0 0.0
    %278 = vmatpush1.msra.mxu0 0.0
    %279 = vmatprep.subr.mxu0 0.0
    %280 = vmatpush1.msra.mxu0 0.0
    %281 = vmatprep.subr.mxu0 0.0
    %282 = vmatpush1.msra.mxu0 0.0
    %283 = vmatprep.subr.mxu0 0.0
    %284 = vmatpush1.msra.mxu0 0.0
    %285 = vmatprep.subr.mxu0 0.0
    %286 = vmatpush1.msra.mxu0 0.0
    %287 = vmatprep.subr.mxu0 0.0
    %288 = vmatpush1.msra.mxu0 0.0
    %289 = vmatprep.subr.mxu0 0.0
    %290 = vmatpush1.msra.mxu0 0.0
    %291 = vmatprep.subr.mxu0 0.0
    %292 = vmatpush1.msra.mxu0 0.0
    %293 = vmatprep.subr.mxu0 0.0
    %294 = vmatpush1.msra.mxu0 0.0
    %295 = vmatprep.subr.mxu0 0.0
    %296 = vmatpush1.msra.mxu0 0.0
    %297 = vmatprep.subr.mxu0 0.0
    %298 = vmatpush1.msra.mxu0 0.0
    %299 = vmatprep.subr.mxu0 0.0
    %300 = vmatpush1.msra.mxu0 0.0
    %301 = vmatprep.subr.mxu0 0.0
    %302 = vmatpush1.msra.mxu0 0.0
    %303 = vmatprep.subr.mxu0 0.0
    %304 = vmatpush1.msra.mxu0 0.0
    %305 = vmatprep.subr.mxu0 0.0
    %306 = vmatpush1.msra.mxu0 0.0
    %307 = vmatprep.subr.mxu0 0.0
    %308 = vmatpush1.msra.mxu0 0.0
    %309 = vmatprep.subr.mxu0 0.0
    %310 = vmatpush1.msra.mxu0 0.0
    %311 = vmatprep.subr.mxu0 0.0
    %312 = vmatpush1.msra.mxu0 0.0
    %313 = vmatprep.mubr.f32.mxu0 0.0
    %314 = vmatmul.mubr.f32.gmra.mrb[0].mxu0 %v241
    %v315 = vpop.f32.mrb[0].mxu0
    %v316 = vadd.f32 %v226, %v315
    %v317 = vpop.f32.mrb[0].mxu0
    %318 = vmatprep.mubr.f32.mxu0 0.0
    %319 = vmatmul.mubr.f32.gmra.mrb[0].mxu0 %v244
    %v320 = vpop.f32.mrb[0].mxu0
    %v321 = vadd.f32 %v231, %v320
    %v322 = vpop.f32.mrb[0].mxu0
    %323 = vmatprep.mubr.f32.mxu0 0.0
    %324 = vmatmul.mubr.f32.gmra.mrb[0].mxu0 %v247
    %v325 = vpop.f32.mrb[0].mxu0
    %v326 = vadd.f32 %v236, %v325
    %v327 = vpop.f32.mrb[0].mxu0
    %328 = vdwg.mxu0
    %v329 = vld [vmem:[%s6] sm:$0x1]
    %v331 = vlaneseq
    %v332 = vshrl.u32 %v331, 7
    %v333 = vsub.s32 0, %v332
    %v334 = vrot.slane %v329, %v333
    %v336 = vadd.f32 %v316, %v334
    %v337 = vadd.f32 %v321, %v334
    %v338 = vadd.f32 %v326, %v334
    %v339 = vmax.f32 %v336, 0.0
    %v340 = vmax.f32 %v337, 0.0
    %v341 = vmax.f32 %v338, 0.0
    %342 = vst.msk [vmem:[%s7] sm:$0xff] %vm239, %v339
    %343 = vst.msk [vmem:[%s7 + $0x8] sm:$0xff] %vm239, %v340
    %344 = vst.msk [vmem:[%s7 + $0x10] sm:$0xff] %vm239, %v341
  $region37: #{_lambda_.7} parent=0 // pred_fallthru
    _
  // Predicated region
  $region38: #{_lambda_.7} parent=0 // pred_check
    _
  $region39: #{_lambda_.7} parent=0 // pred_check_branch
    %346 = sbr.rel (0) target = $region41
  $region40: #{_lambda_.7} parent=0 // pred_region
    _
  $region41: #{_lambda_.7} parent=0 // pred_fallthru
    _
  // Predicated region
  $region42: #{_lambda_.7} parent=0 // pred_check
    _
  $region43: #{_lambda_.7} parent=0 // pred_check_branch
    %348 = sbr.rel (0) target = $region45
  $region44: #{_lambda_.7} parent=0 // pred_region
    _
  $region45: #{_lambda_.7} parent=0 // pred_fallthru
    _

</llo_original>
